<compile_context>
chip_gen: v7x
topology: tpu7x:2x2x1
jax: 0.10.0
libtpu: 0.0.40
codegen_flags: <defaults>
</compile_context>

<pallas_src>
import jax
import jax.numpy as jnp
from jax.experimental import pallas as pl
from jax.experimental.pallas import tpu as pltpu

# Flip to jnp.bfloat16 on v6e/v7x to feed the MXU at bf16 peak (accumulation
# stays f32 via preferred_element_type).  Kept f32 here so the numerics check
# against the pure-JAX reference stays tight.
MXU_DTYPE = jnp.float32


# ----------------------------- Pallas kernels ------------------------------ #
def input_proj_kernel(x_ref, w_ref, b_ref, o_ref):
    """One big MXU matmul: (T*B, E) @ (E, 4H) + (b_ih + b_hh)."""
    o_ref[...] = (jnp.dot(x_ref[...], w_ref[...],
                          preferred_element_type=jnp.float32) + b_ref[...])


def lstm_recurrent_kernel(gx_ref, whh_ref, hlast_ref, h_ref, c_ref):
    """Grid = (batch_shards, time_chunks).  One grid step runs `time_chunk`
    LSTM steps for one batch shard; h/c persist in VMEM scratch across the
    (serial, innermost) time-chunk axis.  Gate order follows PyTorch: i,f,g,o.
    """
    tc = pl.program_id(1)
    H = h_ref.shape[-1]
    time_chunk = gx_ref.shape[0]

    @pl.when(tc == 0)
    def _():
        h_ref[...] = jnp.zeros_like(h_ref)
        c_ref[...] = jnp.zeros_like(c_ref)

    whh = whh_ref[...]                       # (H, 4H) resident constant

    def sigmoid(x):                          # EUP tanh + VPU mul/add, no divide
        return 0.5 * (jnp.tanh(0.5 * x) + 1.0)

    def step(t, carry):
        h, c = carry
        # Recurrent projection only; input projection + bias are precomputed.
        gates = gx_ref[t] + jnp.dot(h.astype(whh.dtype), whh,
                                    preferred_element_type=jnp.float32)
        i_g = sigmoid(gates[:, 0 * H:1 * H])
        f_g = sigmoid(gates[:, 1 * H:2 * H])
        g_g = jnp.tanh(gates[:, 2 * H:3 * H])
        o_g = sigmoid(gates[:, 3 * H:4 * H])
        c_new = f_g * c + i_g * g_g
        h_new = o_g * jnp.tanh(c_new)
        return h_new, c_new

    h, c = jax.lax.fori_loop(0, time_chunk, step,
                             (h_ref[...], c_ref[...]), unroll=True)
    h_ref[...] = h                            # carry state to next time chunk
    c_ref[...] = c

    @pl.when(tc == pl.num_programs(1) - 1)    # true last timestep
    def _():
        hlast_ref[...] = h


# ------------------------------- wrapper ----------------------------------- #
def _largest_divisor_leq(n, cap):
    for d in range(min(n, cap), 0, -1):
        if n % d == 0:
            return d
    return 1


@jax.jit
def simple_lstm_forward(tokens, params):
    """tokens: int32 (B, T).  Returns logits (B, num_classes) float32."""
    emb = params["embedding"]                    # (V, E)
    w_ih, w_hh = params["w_ih"], params["w_hh"]  # (4H, E), (4H, H)
    b_ih, b_hh = params["b_ih"], params["b_hh"]  # (4H,)
    w_fc, b_fc = params["w_fc"], params["b_fc"]  # (C, H), (C,)

    B, T = tokens.shape
    E = emb.shape[1]
    H = w_hh.shape[1]

    # --- glue: embedding gather + time-major layout (XLA) ------------------
    # TODO(synk): embedding gather stays in XLA (data-dependent gather; a
    # Pallas DMA-gather is not worthwhile at these sizes).
    x = jnp.take(emb, tokens, axis=0)            # (B, T, E)
    x = jnp.transpose(x, (1, 0, 2)).reshape(T * B, E)   # time-major rows

    # --- hoisted input projection: one MXU matmul for all timesteps --------
    wih_t = w_ih.T.astype(MXU_DTYPE)             # (E, 4H)
    bias = (b_ih + b_hh).reshape(1, 4 * H).astype(jnp.float32)
    gates_x = pl.pallas_call(
        input_proj_kernel,
        out_shape=jax.ShapeDtypeStruct((T * B, 4 * H), jnp.float32),
    )(x.astype(MXU_DTYPE), wih_t, bias)
    gates_x = gates_x.reshape(T, B, 4 * H)       # (T, B, 4H), bias folded in

    # --- recurrent kernel ---------------------------------------------------
    # Batch shards: split B across the two v7x TensorCores when each shard
    # stays a multiple of 8 sublanes; costs one extra (cheap) grid step on
    # single-core v5e/v6e.
    batch_block = B // 2 if (B % 16 == 0) else B
    # Time chunks: whole sequence per grid step when small (pay pipeline
    # overhead once); chunk long sequences to bound the gates_x VMEM tile.
    time_chunk = _largest_divisor_leq(T, 64)

    n_bb = B // batch_block
    n_tc = T // time_chunk

    whh_t = w_hh.T.astype(MXU_DTYPE)             # (H, 4H)

    grid_spec = pltpu.PrefetchScalarGridSpec(
        num_scalar_prefetch=0,
        grid=(n_bb, n_tc),
        in_specs=[
            pl.BlockSpec((time_chunk, batch_block, 4 * H),
                         lambda b, t: (t, b, 0)),            # gates_x chunk
            pl.BlockSpec((H, 4 * H), lambda b, t: (0, 0)),    # W_hh^T constant
        ],
        out_specs=pl.BlockSpec((batch_block, H), lambda b, t: (b, 0)),
        scratch_shapes=[
            pltpu.VMEM((batch_block, H), jnp.float32),        # h state
            pltpu.VMEM((batch_block, H), jnp.float32),        # c state
        ],
    )

    h_last = pl.pallas_call(
        lstm_recurrent_kernel,
        out_shape=jax.ShapeDtypeStruct((B, H), jnp.float32),
        grid_spec=grid_spec,
        compiler_params=pltpu.CompilerParams(
            dimension_semantics=("parallel", "arbitrary")),
    )(gates_x, whh_t)

    # --- classifier head (XLA): one-shot (B,H)x(H,C) matmul ----------------
    logits = h_last @ w_fc.T + b_fc
    return logits


# --------------------------- pure-JAX reference ---------------------------- #
def reference_forward(tokens, params):
    x = jnp.take(params["embedding"], tokens, axis=0)        # (B, T, E)
    H = params["w_hh"].shape[1]
    B = x.shape[0]

    def step(carry, x_t):
        h, c = carry
        gates = (x_t @ params["w_ih"].T + h @ params["w_hh"].T
                 + params["b_ih"] + params["b_hh"])
        i = jax.nn.sigmoid(gates[:, 0 * H:1 * H])
        f = jax.nn.sigmoid(gates[:, 1 * H:2 * H])
        g = jnp.tanh(gates[:, 2 * H:3 * H])
        o = jax.nn.sigmoid(gates[:, 3 * H:4 * H])
        c = f * c + i * g
        h = o * jnp.tanh(c)
        return (h, c), None

    h0 = jnp.zeros((B, H), jnp.float32)
    (h_last, _), _ = jax.lax.scan(step, (h0, h0), jnp.transpose(x, (1, 0, 2)))
    return h_last @ params["w_fc"].T + params["b_fc"]


# --------------------------------- main ------------------------------------ #
if __name__ == "__main__":
    # Small config consistent with SimpleLSTMConfig (hidden_dim=128 default;
    # B/H chosen sublane/lane aligned so gate slices land on 128-lane bounds).
    VOCAB, E, H, C = 100, 32, 128, 5
    B, T = 16, 8

    key = jax.random.PRNGKey(0)
    ks = jax.random.split(key, 8)
    params = {
        "embedding": jax.random.normal(ks[0], (VOCAB, E), jnp.float32) * 0.1,
        "w_ih": jax.random.normal(ks[1], (4 * H, E), jnp.float32) * 0.1,
        "w_hh": jax.random.normal(ks[2], (4 * H, H), jnp.float32) * 0.1,
        "b_ih": jax.random.normal(ks[3], (4 * H,), jnp.float32) * 0.1,
        "b_hh": jax.random.normal(ks[4], (4 * H,), jnp.float32) * 0.1,
        "w_fc": jax.random.normal(ks[5], (C, H), jnp.float32) * 0.1,
        "b_fc": jax.random.normal(ks[6], (C,), jnp.float32) * 0.1,
    }
    tokens = jax.random.randint(ks[7], (B, T), 0, VOCAB, dtype=jnp.int32)

    out = jax.block_until_ready(simple_lstm_forward(tokens, params))
    ref = reference_forward(tokens, params)

    assert out.shape == (B, C)
    assert jnp.allclose(out, ref, atol=1e-3, rtol=1e-3), (
        "mismatch vs reference: max abs diff = "
        f"{float(jnp.max(jnp.abs(out - ref))):.3e}")
    print("KERNEL_OK")
</pallas_src>

<mosaic_0001>
module attributes {stable_mosaic.version = 11 : i64} {
  func.func @input_proj_kernel(%arg0: memref<128x32xf32, #tpu.memory_space<vmem>>, %arg1: memref<32x512xf32, #tpu.memory_space<vmem>>, %arg2: memref<1x512xf32, #tpu.memory_space<vmem>>, %arg3: memref<128x512xf32, #tpu.memory_space<vmem>>) attributes {dimension_semantics = [], scalar_prefetch = 0 : i64, scratch_operands = 0 : i64, tpu.core_type = #tpu.core_type<tc>} {
    %c0 = arith.constant 0 : index
    %c0_0 = arith.constant 0 : index
    %0 = vector.load %arg0[%c0, %c0_0] : memref<128x32xf32, #tpu.memory_space<vmem>>, vector<128x32xf32>
    %c0_1 = arith.constant 0 : index
    %c0_2 = arith.constant 0 : index
    %1 = vector.load %arg1[%c0_1, %c0_2] : memref<32x512xf32, #tpu.memory_space<vmem>>, vector<32x512xf32>
    %cst = arith.constant dense<0.000000e+00> : vector<128x512xf32>
    %2 = tpu.matmul %0, %1, %cst {dimension_numbers = #tpu.dot_dimension_numbers<[1], [0], [0], [1], [0, 0, 1, 1], [], []>} : vector<128x32xf32>, vector<32x512xf32>, vector<128x512xf32> -> vector<128x512xf32>
    %c0_3 = arith.constant 0 : index
    %c0_4 = arith.constant 0 : index
    %3 = vector.load %arg2[%c0_3, %c0_4] : memref<1x512xf32, #tpu.memory_space<vmem>>, vector<1x512xf32>
    %4 = vector.broadcast %3 : vector<1x512xf32> to vector<128x512xf32>
    %5 = arith.addf %2, %4 : vector<128x512xf32>
    %c0_5 = arith.constant 0 : index
    %c0_6 = arith.constant 0 : index
    %6 = vector.load %arg3[%c0_5, %c0_6] : memref<128x512xf32, #tpu.memory_space<vmem>>, vector<128x512xf32>
    tpu.vector_store %arg3[%c0_5, %c0_6], %5 {strides = array<i32>} : memref<128x512xf32, #tpu.memory_space<vmem>>, vector<128x512xf32>,
    return
  }
}

module attributes {stable_mosaic.version = 11 : i64} {
  func.func @lstm_recurrent_kernel(%arg0: i32, %arg1: i32, %arg2: memref<8x8x512xf32, #tpu.memory_space<vmem>>, %arg3: memref<128x512xf32, #tpu.memory_space<vmem>>, %arg4: memref<8x128xf32, #tpu.memory_space<vmem>>, %arg5: memref<8x128xf32, #tpu.memory_space<vmem>>, %arg6: memref<8x128xf32, #tpu.memory_space<vmem>>) attributes {dimension_semantics = [#tpu.dimension_semantics<parallel>, #tpu.dimension_semantics<arbitrary>], iteration_bounds = array<i64: 2, 1>, scalar_prefetch = 0 : i64, scratch_operands = 2 : i64, tpu.core_type = #tpu.core_type<tc>, window_params = [{transform_indices = @transform_0, window_bounds = array<i64: 8, 8, 512>}, {pipeline_mode = #tpu.pipeline_mode<synchronous>, transform_indices = @transform_1, window_bounds = array<i64: 128, 512>}, {transform_indices = @transform_2, window_bounds = array<i64: 8, 128>}]} {
    %c0_i32 = arith.constant 0 : i32
    %0 = arith.cmpi eq, %arg1, %c0_i32 : i32
    %1 = arith.extui %0 : i1 to i32
    %c0_i32_0 = arith.constant 0 : i32
    %2 = arith.cmpi ne, %1, %c0_i32_0 : i32
    scf.if %2 {
      %cst_108 = arith.constant 0.000000e+00 : f32
      %299 = vector.broadcast %cst_108 : f32 to vector<8x128xf32>
      %c0_109 = arith.constant 0 : index
      %c0_110 = arith.constant 0 : index
      %300 = vector.load %arg5[%c0_109, %c0_110] : memref<8x128xf32, #tpu.memory_space<vmem>>, vector<8x128xf32>
      tpu.vector_store %arg5[%c0_109, %c0_110], %299 {strides = array<i32>} : memref<8x128xf32, #tpu.memory_space<vmem>>, vector<8x128xf32>,
      %cst_111 = arith.constant 0.000000e+00 : f32
      %301 = vector.broadcast %cst_111 : f32 to vector<8x128xf32>
      %c0_112 = arith.constant 0 : index
      %c0_113 = arith.constant 0 : index
      %302 = vector.load %arg6[%c0_112, %c0_113] : memref<8x128xf32, #tpu.memory_space<vmem>>, vector<8x128xf32>
      tpu.vector_store %arg6[%c0_112, %c0_113], %301 {strides = array<i32>} : memref<8x128xf32, #tpu.memory_space<vmem>>, vector<8x128xf32>,
    } else {
    }
    %c0 = arith.constant 0 : index
    %c0_1 = arith.constant 0 : index
    %3 = vector.load %arg3[%c0, %c0_1] : memref<128x512xf32, #tpu.memory_space<vmem>>, vector<128x512xf32>
    %c0_2 = arith.constant 0 : index
    %c0_3 = arith.constant 0 : index
    %4 = vector.load %arg5[%c0_2, %c0_3] : memref<8x128xf32, #tpu.memory_space<vmem>>, vector<8x128xf32>
    %c0_4 = arith.constant 0 : index
    %c0_5 = arith.constant 0 : index
    %5 = vector.load %arg6[%c0_4, %c0_5] : memref<8x128xf32, #tpu.memory_space<vmem>>, vector<8x128xf32>
    %c0_i32_6 = arith.constant 0 : i32
    %6 = arith.index_cast %c0_i32_6 : i32 to index
    %c0_7 = arith.constant 0 : index
    %c0_8 = arith.constant 0 : index
    %7 = vector.load %arg2[%6, %c0_7, %c0_8] : memref<8x8x512xf32, #tpu.memory_space<vmem>>, vector<1x8x512xf32>
    %8 = vector.shape_cast %7 : vector<1x8x512xf32> to vector<8x512xf32>
    %cst = arith.constant dense<0.000000e+00> : vector<8x512xf32>
    %9 = tpu.matmul %4, %3, %cst {dimension_numbers = #tpu.dot_dimension_numbers<[1], [0], [0], [1], [0, 0, 1, 1], [], []>} : vector<8x128xf32>, vector<128x512xf32>, vector<8x512xf32> -> vector<8x512xf32>
    %10 = arith.addf %8, %9 : vector<8x512xf32>
    %11 = vector.extract_strided_slice %10 {offsets = [0, 0], sizes = [8, 128], strides = [1, 1]} : vector<8x512xf32> to vector<8x128xf32>
    %cst_9 = arith.constant 5.000000e-01 : f32
    %12 = vector.broadcast %cst_9 : f32 to vector<8x128xf32>
    %13 = arith.mulf %12, %11 : vector<8x128xf32>
    %14 = math.tanh %13 : vector<8x128xf32>
    %cst_10 = arith.constant 1.000000e+00 : f32
    %15 = vector.broadcast %cst_10 : f32 to vector<8x128xf32>
    %16 = arith.addf %14, %15 : vector<8x128xf32>
    %cst_11 = arith.constant 5.000000e-01 : f32
    %17 = vector.broadcast %cst_11 : f32 to vector<8x128xf32>
    %18 = arith.mulf %17, %16 : vector<8x128xf32>
    %19 = vector.extract_strided_slice %10 {offsets = [0, 128], sizes = [8, 128], strides = [1, 1]} : vector<8x512xf32> to vector<8x128xf32>
    %cst_12 = arith.constant 5.000000e-01 : f32
    %20 = vector.broadcast %cst_12 : f32 to vector<8x128xf32>
    %21 = arith.mulf %20, %19 : vector<8x128xf32>
    %22 = math.tanh %21 : vector<8x128xf32>
    %cst_13 = arith.constant 1.000000e+00 : f32
    %23 = vector.broadcast %cst_13 : f32 to vector<8x128xf32>
    %24 = arith.addf %22, %23 : vector<8x128xf32>
    %cst_14 = arith.constant 5.000000e-01 : f32
    %25 = vector.broadcast %cst_14 : f32 to vector<8x128xf32>
    %26 = arith.mulf %25, %24 : vector<8x128xf32>
    %27 = vector.extract_strided_slice %10 {offsets = [0, 256], sizes = [8, 128], strides = [1, 1]} : vector<8x512xf32> to vector<8x128xf32>
    %28 = math.tanh %27 : vector<8x128xf32>
    %29 = vector.extract_strided_slice %10 {offsets = [0, 384], sizes = [8, 128], strides = [1, 1]} : vector<8x512xf32> to vector<8x128xf32>
    %cst_15 = arith.constant 5.000000e-01 : f32
    %30 = vector.broadcast %cst_15 : f32 to vector<8x128xf32>
    %31 = arith.mulf %30, %29 : vector<8x128xf32>
    %32 = math.tanh %31 : vector<8x128xf32>
    %cst_16 = arith.constant 1.000000e+00 : f32
    %33 = vector.broadcast %cst_16 : f32 to vector<8x128xf32>
    %34 = arith.addf %32, %33 : vector<8x128xf32>
    %cst_17 = arith.constant 5.000000e-01 : f32
    %35 = vector.broadcast %cst_17 : f32 to vector<8x128xf32>
    %36 = arith.mulf %35, %34 : vector<8x128xf32>
    %37 = arith.mulf %26, %5 : vector<8x128xf32>
    %38 = arith.mulf %18, %28 : vector<8x128xf32>
    %39 = arith.addf %37, %38 : vector<8x128xf32>
    %40 = math.tanh %39 : vector<8x128xf32>
    %41 = arith.mulf %36, %40 : vector<8x128xf32>
    %c1_i32 = arith.constant 1 : i32
    %42 = arith.index_cast %c1_i32 : i32 to index
    %c0_18 = arith.constant 0 : index
    %c0_19 = arith.constant 0 : index
    %43 = vector.load %arg2[%42, %c0_18, %c0_19] : memref<8x8x512xf32, #tpu.memory_space<vmem>>, vector<1x8x512xf32>
    %44 = vector.shape_cast %43 : vector<1x8x512xf32> to vector<8x512xf32>
    %cst_20 = arith.constant dense<0.000000e+00> : vector<8x512xf32>
    %45 = tpu.matmul %41, %3, %cst_20 {dimension_numbers = #tpu.dot_dimension_numbers<[1], [0], [0], [1], [0, 0, 1, 1], [], []>} : vector<8x128xf32>, vector<128x512xf32>, vector<8x512xf32> -> vector<8x512xf32>
    %46 = arith.addf %44, %45 : vector<8x512xf32>
    %47 = vector.extract_strided_slice %46 {offsets = [0, 0], sizes = [8, 128], strides = [1, 1]} : vector<8x512xf32> to vector<8x128xf32>
    %cst_21 = arith.constant 5.000000e-01 : f32
    %48 = vector.broadcast %cst_21 : f32 to vector<8x128xf32>
    %49 = arith.mulf %48, %47 : vector<8x128xf32>
    %50 = math.tanh %49 : vector<8x128xf32>
    %cst_22 = arith.constant 1.000000e+00 : f32
    %51 = vector.broadcast %cst_22 : f32 to vector<8x128xf32>
    %52 = arith.addf %50, %51 : vector<8x128xf32>
    %cst_23 = arith.constant 5.000000e-01 : f32
    %53 = vector.broadcast %cst_23 : f32 to vector<8x128xf32>
    %54 = arith.mulf %53, %52 : vector<8x128xf32>
    %55 = vector.extract_strided_slice %46 {offsets = [0, 128], sizes = [8, 128], strides = [1, 1]} : vector<8x512xf32> to vector<8x128xf32>
    %cst_24 = arith.constant 5.000000e-01 : f32
    %56 = vector.broadcast %cst_24 : f32 to vector<8x128xf32>
    %57 = arith.mulf %56, %55 : vector<8x128xf32>
    %58 = math.tanh %57 : vector<8x128xf32>
    %cst_25 = arith.constant 1.000000e+00 : f32
    %59 = vector.broadcast %cst_25 : f32 to vector<8x128xf32>
    %60 = arith.addf %58, %59 : vector<8x128xf32>
    %cst_26 = arith.constant 5.000000e-01 : f32
    %61 = vector.broadcast %cst_26 : f32 to vector<8x128xf32>
    %62 = arith.mulf %61, %60 : vector<8x128xf32>
    %63 = vector.extract_strided_slice %46 {offsets = [0, 256], sizes = [8, 128], strides = [1, 1]} : vector<8x512xf32> to vector<8x128xf32>
    %64 = math.tanh %63 : vector<8x128xf32>
    %65 = vector.extract_strided_slice %46 {offsets = [0, 384], sizes = [8, 128], strides = [1, 1]} : vector<8x512xf32> to vector<8x128xf32>
    %cst_27 = arith.constant 5.000000e-01 : f32
    %66 = vector.broadcast %cst_27 : f32 to vector<8x128xf32>
    %67 = arith.mulf %66, %65 : vector<8x128xf32>
    %68 = math.tanh %67 : vector<8x128xf32>
    %cst_28 = arith.constant 1.000000e+00 : f32
    %69 = vector.broadcast %cst_28 : f32 to vector<8x128xf32>
    %70 = arith.addf %68, %69 : vector<8x128xf32>
    %cst_29 = arith.constant 5.000000e-01 : f32
    %71 = vector.broadcast %cst_29 : f32 to vector<8x128xf32>
    %72 = arith.mulf %71, %70 : vector<8x128xf32>
    %73 = arith.mulf %62, %39 : vector<8x128xf32>
    %74 = arith.mulf %54, %64 : vector<8x128xf32>
    %75 = arith.addf %73, %74 : vector<8x128xf32>
    %76 = math.tanh %75 : vector<8x128xf32>
    %77 = arith.mulf %72, %76 : vector<8x128xf32>
    %c2_i32 = arith.constant 2 : i32
    %78 = arith.index_cast %c2_i32 : i32 to index
    %c0_30 = arith.constant 0 : index
    %c0_31 = arith.constant 0 : index
    %79 = vector.load %arg2[%78, %c0_30, %c0_31] : memref<8x8x512xf32, #tpu.memory_space<vmem>>, vector<1x8x512xf32>
    %80 = vector.shape_cast %79 : vector<1x8x512xf32> to vector<8x512xf32>
    %cst_32 = arith.constant dense<0.000000e+00> : vector<8x512xf32>
    %81 = tpu.matmul %77, %3, %cst_32 {dimension_numbers = #tpu.dot_dimension_numbers<[1], [0], [0], [1], [0, 0, 1, 1], [], []>} : vector<8x128xf32>, vector<128x512xf32>, vector<8x512xf32> -> vector<8x512xf32>
    %82 = arith.addf %80, %81 : vector<8x512xf32>
    %83 = vector.extract_strided_slice %82 {offsets = [0, 0], sizes = [8, 128], strides = [1, 1]} : vector<8x512xf32> to vector<8x128xf32>
    %cst_33 = arith.constant 5.000000e-01 : f32
    %84 = vector.broadcast %cst_33 : f32 to vector<8x128xf32>
    %85 = arith.mulf %84, %83 : vector<8x128xf32>
    %86 = math.tanh %85 : vector<8x128xf32>
    %cst_34 = arith.constant 1.000000e+00 : f32
    %87 = vector.broadcast %cst_34 : f32 to vector<8x128xf32>
    %88 = arith.addf %86, %87 : vector<8x128xf32>
    %cst_35 = arith.constant 5.000000e-01 : f32
    %89 = vector.broadcast %cst_35 : f32 to vector<8x128xf32>
    %90 = arith.mulf %89, %88 : vector<8x128xf32>
    %91 = vector.extract_strided_slice %82 {offsets = [0, 128], sizes = [8, 128], strides = [1, 1]} : vector<8x512xf32> to vector<8x128xf32>
    %cst_36 = arith.constant 5.000000e-01 : f32
    %92 = vector.broadcast %cst_36 : f32 to vector<8x128xf32>
    %93 = arith.mulf %92, %91 : vector<8x128xf32>
    %94 = math.tanh %93 : vector<8x128xf32>
    %cst_37 = arith.constant 1.000000e+00 : f32
    %95 = vector.broadcast %cst_37 : f32 to vector<8x128xf32>
    %96 = arith.addf %94, %95 : vector<8x128xf32>
    %cst_38 = arith.constant 5.000000e-01 : f32
    %97 = vector.broadcast %cst_38 : f32 to vector<8x128xf32>
    %98 = arith.mulf %97, %96 : vector<8x128xf32>
    %99 = vector.extract_strided_slice %82 {offsets = [0, 256], sizes = [8, 128], strides = [1, 1]} : vector<8x512xf32> to vector<8x128xf32>
    %100 = math.tanh %99 : vector<8x128xf32>
    %101 = vector.extract_strided_slice %82 {offsets = [0, 384], sizes = [8, 128], strides = [1, 1]} : vector<8x512xf32> to vector<8x128xf32>
    %cst_39 = arith.constant 5.000000e-01 : f32
    %102 = vector.broadcast %cst_39 : f32 to vector<8x128xf32>
    %103 = arith.mulf %102, %101 : vector<8x128xf32>
    %104 = math.tanh %103 : vector<8x128xf32>
    %cst_40 = arith.constant 1.000000e+00 : f32
    %105 = vector.broadcast %cst_40 : f32 to vector<8x128xf32>
    %106 = arith.addf %104, %105 : vector<8x128xf32>
    %cst_41 = arith.constant 5.000000e-01 : f32
    %107 = vector.broadcast %cst_41 : f32 to vector<8x128xf32>
    %108 = arith.mulf %107, %106 : vector<8x128xf32>
    %109 = arith.mulf %98, %75 : vector<8x128xf32>
    %110 = arith.mulf %90, %100 : vector<8x128xf32>
    %111 = arith.addf %109, %110 : vector<8x128xf32>
    %112 = math.tanh %111 : vector<8x128xf32>
    %113 = arith.mulf %108, %112 : vector<8x128xf32>
    %c3_i32 = arith.constant 3 : i32
    %114 = arith.index_cast %c3_i32 : i32 to index
    %c0_42 = arith.constant 0 : index
    %c0_43 = arith.constant 0 : index
    %115 = vector.load %arg2[%114, %c0_42, %c0_43] : memref<8x8x512xf32, #tpu.memory_space<vmem>>, vector<1x8x512xf32>
    %116 = vector.shape_cast %115 : vector<1x8x512xf32> to vector<8x512xf32>
    %cst_44 = arith.constant dense<0.000000e+00> : vector<8x512xf32>
    %117 = tpu.matmul %113, %3, %cst_44 {dimension_numbers = #tpu.dot_dimension_numbers<[1], [0], [0], [1], [0, 0, 1, 1], [], []>} : vector<8x128xf32>, vector<128x512xf32>, vector<8x512xf32> -> vector<8x512xf32>
    %118 = arith.addf %116, %117 : vector<8x512xf32>
    %119 = vector.extract_strided_slice %118 {offsets = [0, 0], sizes = [8, 128], strides = [1, 1]} : vector<8x512xf32> to vector<8x128xf32>
    %cst_45 = arith.constant 5.000000e-01 : f32
    %120 = vector.broadcast %cst_45 : f32 to vector<8x128xf32>
    %121 = arith.mulf %120, %119 : vector<8x128xf32>
    %122 = math.tanh %121 : vector<8x128xf32>
    %cst_46 = arith.constant 1.000000e+00 : f32
    %123 = vector.broadcast %cst_46 : f32 to vector<8x128xf32>
    %124 = arith.addf %122, %123 : vector<8x128xf32>
    %cst_47 = arith.constant 5.000000e-01 : f32
    %125 = vector.broadcast %cst_47 : f32 to vector<8x128xf32>
    %126 = arith.mulf %125, %124 : vector<8x128xf32>
    %127 = vector.extract_strided_slice %118 {offsets = [0, 128], sizes = [8, 128], strides = [1, 1]} : vector<8x512xf32> to vector<8x128xf32>
    %cst_48 = arith.constant 5.000000e-01 : f32
    %128 = vector.broadcast %cst_48 : f32 to vector<8x128xf32>
    %129 = arith.mulf %128, %127 : vector<8x128xf32>
    %130 = math.tanh %129 : vector<8x128xf32>
    %cst_49 = arith.constant 1.000000e+00 : f32
    %131 = vector.broadcast %cst_49 : f32 to vector<8x128xf32>
    %132 = arith.addf %130, %131 : vector<8x128xf32>
    %cst_50 = arith.constant 5.000000e-01 : f32
    %133 = vector.broadcast %cst_50 : f32 to vector<8x128xf32>
    %134 = arith.mulf %133, %132 : vector<8x128xf32>
    %135 = vector.extract_strided_slice %118 {offsets = [0, 256], sizes = [8, 128], strides = [1, 1]} : vector<8x512xf32> to vector<8x128xf32>
    %136 = math.tanh %135 : vector<8x128xf32>
    %137 = vector.extract_strided_slice %118 {offsets = [0, 384], sizes = [8, 128], strides = [1, 1]} : vector<8x512xf32> to vector<8x128xf32>
    %cst_51 = arith.constant 5.000000e-01 : f32
    %138 = vector.broadcast %cst_51 : f32 to vector<8x128xf32>
    %139 = arith.mulf %138, %137 : vector<8x128xf32>
    %140 = math.tanh %139 : vector<8x128xf32>
    %cst_52 = arith.constant 1.000000e+00 : f32
    %141 = vector.broadcast %cst_52 : f32 to vector<8x128xf32>
    %142 = arith.addf %140, %141 : vector<8x128xf32>
    %cst_53 = arith.constant 5.000000e-01 : f32
    %143 = vector.broadcast %cst_53 : f32 to vector<8x128xf32>
    %144 = arith.mulf %143, %142 : vector<8x128xf32>
    %145 = arith.mulf %134, %111 : vector<8x128xf32>
    %146 = arith.mulf %126, %136 : vector<8x128xf32>
    %147 = arith.addf %145, %146 : vector<8x128xf32>
    %148 = math.tanh %147 : vector<8x128xf32>
    %149 = arith.mulf %144, %148 : vector<8x128xf32>
    %c4_i32 = arith.constant 4 : i32
    %150 = arith.index_cast %c4_i32 : i32 to index
    %c0_54 = arith.constant 0 : index
    %c0_55 = arith.constant 0 : index
    %151 = vector.load %arg2[%150, %c0_54, %c0_55] : memref<8x8x512xf32, #tpu.memory_space<vmem>>, vector<1x8x512xf32>
    %152 = vector.shape_cast %151 : vector<1x8x512xf32> to vector<8x512xf32>
    %cst_56 = arith.constant dense<0.000000e+00> : vector<8x512xf32>
    %153 = tpu.matmul %149, %3, %cst_56 {dimension_numbers = #tpu.dot_dimension_numbers<[1], [0], [0], [1], [0, 0, 1, 1], [], []>} : vector<8x128xf32>, vector<128x512xf32>, vector<8x512xf32> -> vector<8x512xf32>
    %154 = arith.addf %152, %153 : vector<8x512xf32>
    %155 = vector.extract_strided_slice %154 {offsets = [0, 0], sizes = [8, 128], strides = [1, 1]} : vector<8x512xf32> to vector<8x128xf32>
    %cst_57 = arith.constant 5.000000e-01 : f32
    %156 = vector.broadcast %cst_57 : f32 to vector<8x128xf32>
    %157 = arith.mulf %156, %155 : vector<8x128xf32>
    %158 = math.tanh %157 : vector<8x128xf32>
    %cst_58 = arith.constant 1.000000e+00 : f32
    %159 = vector.broadcast %cst_58 : f32 to vector<8x128xf32>
    %160 = arith.addf %158, %159 : vector<8x128xf32>
    %cst_59 = arith.constant 5.000000e-01 : f32
    %161 = vector.broadcast %cst_59 : f32 to vector<8x128xf32>
    %162 = arith.mulf %161, %160 : vector<8x128xf32>
    %163 = vector.extract_strided_slice %154 {offsets = [0, 128], sizes = [8, 128], strides = [1, 1]} : vector<8x512xf32> to vector<8x128xf32>
    %cst_60 = arith.constant 5.000000e-01 : f32
    %164 = vector.broadcast %cst_60 : f32 to vector<8x128xf32>
    %165 = arith.mulf %164, %163 : vector<8x128xf32>
    %166 = math.tanh %165 : vector<8x128xf32>
    %cst_61 = arith.constant 1.000000e+00 : f32
    %167 = vector.broadcast %cst_61 : f32 to vector<8x128xf32>
    %168 = arith.addf %166, %167 : vector<8x128xf32>
    %cst_62 = arith.constant 5.000000e-01 : f32
    %169 = vector.broadcast %cst_62 : f32 to vector<8x128xf32>
    %170 = arith.mulf %169, %168 : vector<8x128xf32>
    %171 = vector.extract_strided_slice %154 {offsets = [0, 256], sizes = [8, 128], strides = [1, 1]} : vector<8x512xf32> to vector<8x128xf32>
    %172 = math.tanh %171 : vector<8x128xf32>
    %173 = vector.extract_strided_slice %154 {offsets = [0, 384], sizes = [8, 128], strides = [1, 1]} : vector<8x512xf32> to vector<8x128xf32>
    %cst_63 = arith.constant 5.000000e-01 : f32
    %174 = vector.broadcast %cst_63 : f32 to vector<8x128xf32>
    %175 = arith.mulf %174, %173 : vector<8x128xf32>
    %176 = math.tanh %175 : vector<8x128xf32>
    %cst_64 = arith.constant 1.000000e+00 : f32
    %177 = vector.broadcast %cst_64 : f32 to vector<8x128xf32>
    %178 = arith.addf %176, %177 : vector<8x128xf32>
    %cst_65 = arith.constant 5.000000e-01 : f32
    %179 = vector.broadcast %cst_65 : f32 to vector<8x128xf32>
    %180 = arith.mulf %179, %178 : vector<8x128xf32>
    %181 = arith.mulf %170, %147 : vector<8x128xf32>
    %182 = arith.mulf %162, %172 : vector<8x128xf32>
    %183 = arith.addf %181, %182 : vector<8x128xf32>
    %184 = math.tanh %183 : vector<8x128xf32>
    %185 = arith.mulf %180, %184 : vector<8x128xf32>
    %c5_i32 = arith.constant 5 : i32
    %186 = arith.index_cast %c5_i32 : i32 to index
    %c0_66 = arith.constant 0 : index
    %c0_67 = arith.constant 0 : index
    %187 = vector.load %arg2[%186, %c0_66, %c0_67] : memref<8x8x512xf32, #tpu.memory_space<vmem>>, vector<1x8x512xf32>
    %188 = vector.shape_cast %187 : vector<1x8x512xf32> to vector<8x512xf32>
    %cst_68 = arith.constant dense<0.000000e+00> : vector<8x512xf32>
    %189 = tpu.matmul %185, %3, %cst_68 {dimension_numbers = #tpu.dot_dimension_numbers<[1], [0], [0], [1], [0, 0, 1, 1], [], []>} : vector<8x128xf32>, vector<128x512xf32>, vector<8x512xf32> -> vector<8x512xf32>
    %190 = arith.addf %188, %189 : vector<8x512xf32>
    %191 = vector.extract_strided_slice %190 {offsets = [0, 0], sizes = [8, 128], strides = [1, 1]} : vector<8x512xf32> to vector<8x128xf32>
    %cst_69 = arith.constant 5.000000e-01 : f32
    %192 = vector.broadcast %cst_69 : f32 to vector<8x128xf32>
    %193 = arith.mulf %192, %191 : vector<8x128xf32>
    %194 = math.tanh %193 : vector<8x128xf32>
    %cst_70 = arith.constant 1.000000e+00 : f32
    %195 = vector.broadcast %cst_70 : f32 to vector<8x128xf32>
    %196 = arith.addf %194, %195 : vector<8x128xf32>
    %cst_71 = arith.constant 5.000000e-01 : f32
    %197 = vector.broadcast %cst_71 : f32 to vector<8x128xf32>
    %198 = arith.mulf %197, %196 : vector<8x128xf32>
    %199 = vector.extract_strided_slice %190 {offsets = [0, 128], sizes = [8, 128], strides = [1, 1]} : vector<8x512xf32> to vector<8x128xf32>
    %cst_72 = arith.constant 5.000000e-01 : f32
    %200 = vector.broadcast %cst_72 : f32 to vector<8x128xf32>
    %201 = arith.mulf %200, %199 : vector<8x128xf32>
    %202 = math.tanh %201 : vector<8x128xf32>
    %cst_73 = arith.constant 1.000000e+00 : f32
    %203 = vector.broadcast %cst_73 : f32 to vector<8x128xf32>
    %204 = arith.addf %202, %203 : vector<8x128xf32>
    %cst_74 = arith.constant 5.000000e-01 : f32
    %205 = vector.broadcast %cst_74 : f32 to vector<8x128xf32>
    %206 = arith.mulf %205, %204 : vector<8x128xf32>
    %207 = vector.extract_strided_slice %190 {offsets = [0, 256], sizes = [8, 128], strides = [1, 1]} : vector<8x512xf32> to vector<8x128xf32>
    %208 = math.tanh %207 : vector<8x128xf32>
    %209 = vector.extract_strided_slice %190 {offsets = [0, 384], sizes = [8, 128], strides = [1, 1]} : vector<8x512xf32> to vector<8x128xf32>
    %cst_75 = arith.constant 5.000000e-01 : f32
    %210 = vector.broadcast %cst_75 : f32 to vector<8x128xf32>
    %211 = arith.mulf %210, %209 : vector<8x128xf32>
    %212 = math.tanh %211 : vector<8x128xf32>
    %cst_76 = arith.constant 1.000000e+00 : f32
    %213 = vector.broadcast %cst_76 : f32 to vector<8x128xf32>
    %214 = arith.addf %212, %213 : vector<8x128xf32>
    %cst_77 = arith.constant 5.000000e-01 : f32
    %215 = vector.broadcast %cst_77 : f32 to vector<8x128xf32>
    %216 = arith.mulf %215, %214 : vector<8x128xf32>
    %217 = arith.mulf %206, %183 : vector<8x128xf32>
    %218 = arith.mulf %198, %208 : vector<8x128xf32>
    %219 = arith.addf %217, %218 : vector<8x128xf32>
    %220 = math.tanh %219 : vector<8x128xf32>
    %221 = arith.mulf %216, %220 : vector<8x128xf32>
    %c6_i32 = arith.constant 6 : i32
    %222 = arith.index_cast %c6_i32 : i32 to index
    %c0_78 = arith.constant 0 : index
    %c0_79 = arith.constant 0 : index
    %223 = vector.load %arg2[%222, %c0_78, %c0_79] : memref<8x8x512xf32, #tpu.memory_space<vmem>>, vector<1x8x512xf32>
    %224 = vector.shape_cast %223 : vector<1x8x512xf32> to vector<8x512xf32>
    %cst_80 = arith.constant dense<0.000000e+00> : vector<8x512xf32>
    %225 = tpu.matmul %221, %3, %cst_80 {dimension_numbers = #tpu.dot_dimension_numbers<[1], [0], [0], [1], [0, 0, 1, 1], [], []>} : vector<8x128xf32>, vector<128x512xf32>, vector<8x512xf32> -> vector<8x512xf32>
    %226 = arith.addf %224, %225 : vector<8x512xf32>
    %227 = vector.extract_strided_slice %226 {offsets = [0, 0], sizes = [8, 128], strides = [1, 1]} : vector<8x512xf32> to vector<8x128xf32>
    %cst_81 = arith.constant 5.000000e-01 : f32
    %228 = vector.broadcast %cst_81 : f32 to vector<8x128xf32>
    %229 = arith.mulf %228, %227 : vector<8x128xf32>
    %230 = math.tanh %229 : vector<8x128xf32>
    %cst_82 = arith.constant 1.000000e+00 : f32
    %231 = vector.broadcast %cst_82 : f32 to vector<8x128xf32>
    %232 = arith.addf %230, %231 : vector<8x128xf32>
    %cst_83 = arith.constant 5.000000e-01 : f32
    %233 = vector.broadcast %cst_83 : f32 to vector<8x128xf32>
    %234 = arith.mulf %233, %232 : vector<8x128xf32>
    %235 = vector.extract_strided_slice %226 {offsets = [0, 128], sizes = [8, 128], strides = [1, 1]} : vector<8x512xf32> to vector<8x128xf32>
    %cst_84 = arith.constant 5.000000e-01 : f32
    %236 = vector.broadcast %cst_84 : f32 to vector<8x128xf32>
    %237 = arith.mulf %236, %235 : vector<8x128xf32>
    %238 = math.tanh %237 : vector<8x128xf32>
    %cst_85 = arith.constant 1.000000e+00 : f32
    %239 = vector.broadcast %cst_85 : f32 to vector<8x128xf32>
    %240 = arith.addf %238, %239 : vector<8x128xf32>
    %cst_86 = arith.constant 5.000000e-01 : f32
    %241 = vector.broadcast %cst_86 : f32 to vector<8x128xf32>
    %242 = arith.mulf %241, %240 : vector<8x128xf32>
    %243 = vector.extract_strided_slice %226 {offsets = [0, 256], sizes = [8, 128], strides = [1, 1]} : vector<8x512xf32> to vector<8x128xf32>
    %244 = math.tanh %243 : vector<8x128xf32>
    %245 = vector.extract_strided_slice %226 {offsets = [0, 384], sizes = [8, 128], strides = [1, 1]} : vector<8x512xf32> to vector<8x128xf32>
    %cst_87 = arith.constant 5.000000e-01 : f32
    %246 = vector.broadcast %cst_87 : f32 to vector<8x128xf32>
    %247 = arith.mulf %246, %245 : vector<8x128xf32>
    %248 = math.tanh %247 : vector<8x128xf32>
    %cst_88 = arith.constant 1.000000e+00 : f32
    %249 = vector.broadcast %cst_88 : f32 to vector<8x128xf32>
    %250 = arith.addf %248, %249 : vector<8x128xf32>
    %cst_89 = arith.constant 5.000000e-01 : f32
    %251 = vector.broadcast %cst_89 : f32 to vector<8x128xf32>
    %252 = arith.mulf %251, %250 : vector<8x128xf32>
    %253 = arith.mulf %242, %219 : vector<8x128xf32>
    %254 = arith.mulf %234, %244 : vector<8x128xf32>
    %255 = arith.addf %253, %254 : vector<8x128xf32>
    %256 = math.tanh %255 : vector<8x128xf32>
    %257 = arith.mulf %252, %256 : vector<8x128xf32>
    %c7_i32 = arith.constant 7 : i32
    %258 = arith.index_cast %c7_i32 : i32 to index
    %c0_90 = arith.constant 0 : index
    %c0_91 = arith.constant 0 : index
    %259 = vector.load %arg2[%258, %c0_90, %c0_91] : memref<8x8x512xf32, #tpu.memory_space<vmem>>, vector<1x8x512xf32>
    %260 = vector.shape_cast %259 : vector<1x8x512xf32> to vector<8x512xf32>
    %cst_92 = arith.constant dense<0.000000e+00> : vector<8x512xf32>
    %261 = tpu.matmul %257, %3, %cst_92 {dimension_numbers = #tpu.dot_dimension_numbers<[1], [0], [0], [1], [0, 0, 1, 1], [], []>} : vector<8x128xf32>, vector<128x512xf32>, vector<8x512xf32> -> vector<8x512xf32>
    %262 = arith.addf %260, %261 : vector<8x512xf32>
    %263 = vector.extract_strided_slice %262 {offsets = [0, 0], sizes = [8, 128], strides = [1, 1]} : vector<8x512xf32> to vector<8x128xf32>
    %cst_93 = arith.constant 5.000000e-01 : f32
    %264 = vector.broadcast %cst_93 : f32 to vector<8x128xf32>
    %265 = arith.mulf %264, %263 : vector<8x128xf32>
    %266 = math.tanh %265 : vector<8x128xf32>
    %cst_94 = arith.constant 1.000000e+00 : f32
    %267 = vector.broadcast %cst_94 : f32 to vector<8x128xf32>
    %268 = arith.addf %266, %267 : vector<8x128xf32>
    %cst_95 = arith.constant 5.000000e-01 : f32
    %269 = vector.broadcast %cst_95 : f32 to vector<8x128xf32>
    %270 = arith.mulf %269, %268 : vector<8x128xf32>
    %271 = vector.extract_strided_slice %262 {offsets = [0, 128], sizes = [8, 128], strides = [1, 1]} : vector<8x512xf32> to vector<8x128xf32>
    %cst_96 = arith.constant 5.000000e-01 : f32
    %272 = vector.broadcast %cst_96 : f32 to vector<8x128xf32>
    %273 = arith.mulf %272, %271 : vector<8x128xf32>
    %274 = math.tanh %273 : vector<8x128xf32>
    %cst_97 = arith.constant 1.000000e+00 : f32
    %275 = vector.broadcast %cst_97 : f32 to vector<8x128xf32>
    %276 = arith.addf %274, %275 : vector<8x128xf32>
    %cst_98 = arith.constant 5.000000e-01 : f32
    %277 = vector.broadcast %cst_98 : f32 to vector<8x128xf32>
    %278 = arith.mulf %277, %276 : vector<8x128xf32>
    %279 = vector.extract_strided_slice %262 {offsets = [0, 256], sizes = [8, 128], strides = [1, 1]} : vector<8x512xf32> to vector<8x128xf32>
    %280 = math.tanh %279 : vector<8x128xf32>
    %281 = vector.extract_strided_slice %262 {offsets = [0, 384], sizes = [8, 128], strides = [1, 1]} : vector<8x512xf32> to vector<8x128xf32>
    %cst_99 = arith.constant 5.000000e-01 : f32
    %282 = vector.broadcast %cst_99 : f32 to vector<8x128xf32>
    %283 = arith.mulf %282, %281 : vector<8x128xf32>
    %284 = math.tanh %283 : vector<8x128xf32>
    %cst_100 = arith.constant 1.000000e+00 : f32
    %285 = vector.broadcast %cst_100 : f32 to vector<8x128xf32>
    %286 = arith.addf %284, %285 : vector<8x128xf32>
    %cst_101 = arith.constant 5.000000e-01 : f32
    %287 = vector.broadcast %cst_101 : f32 to vector<8x128xf32>
    %288 = arith.mulf %287, %286 : vector<8x128xf32>
    %289 = arith.mulf %278, %255 : vector<8x128xf32>
    %290 = arith.mulf %270, %280 : vector<8x128xf32>
    %291 = arith.addf %289, %290 : vector<8x128xf32>
    %292 = math.tanh %291 : vector<8x128xf32>
    %293 = arith.mulf %288, %292 : vector<8x128xf32>
    %c8_i32 = arith.constant 8 : i32
    %c0_102 = arith.constant 0 : index
    %c0_103 = arith.constant 0 : index
    %294 = vector.load %arg5[%c0_102, %c0_103] : memref<8x128xf32, #tpu.memory_space<vmem>>, vector<8x128xf32>
    tpu.vector_store %arg5[%c0_102, %c0_103], %293 {strides = array<i32>} : memref<8x128xf32, #tpu.memory_space<vmem>>, vector<8x128xf32>,
    %c0_104 = arith.constant 0 : index
    %c0_105 = arith.constant 0 : index
    %295 = vector.load %arg6[%c0_104, %c0_105] : memref<8x128xf32, #tpu.memory_space<vmem>>, vector<8x128xf32>
    tpu.vector_store %arg6[%c0_104, %c0_105], %291 {strides = array<i32>} : memref<8x128xf32, #tpu.memory_space<vmem>>, vector<8x128xf32>,
    %c0_i32_106 = arith.constant 0 : i32
    %296 = arith.cmpi eq, %arg1, %c0_i32_106 : i32
    %297 = arith.extui %296 : i1 to i32
    %c0_i32_107 = arith.constant 0 : i32
    %298 = arith.cmpi ne, %297, %c0_i32_107 : i32
    scf.if %298 {
      %c0_108 = arith.constant 0 : index
      %c0_109 = arith.constant 0 : index
      %299 = vector.load %arg4[%c0_108, %c0_109] : memref<8x128xf32, #tpu.memory_space<vmem>>, vector<8x128xf32>
      tpu.vector_store %arg4[%c0_108, %c0_109], %293 {strides = array<i32>} : memref<8x128xf32, #tpu.memory_space<vmem>>, vector<8x128xf32>,
    } else {
    }
    return
  }
  func.func @transform_0(%arg0: i32, %arg1: i32) -> (i32, i32, i32) {
    %c0_i32 = arith.constant 0 : i32
    %c0_i32_0 = arith.constant 0 : i32
    return %arg1, %arg0, %c0_i32 : i32, i32, i32
  }
  func.func @transform_1(%arg0: i32, %arg1: i32) -> (i32, i32) {
    %c0_i32 = arith.constant 0 : i32
    %c0_i32_0 = arith.constant 0 : i32
    %c0_i32_1 = arith.constant 0 : i32
    return %c0_i32, %c0_i32_0 : i32, i32
  }
  func.func @transform_2(%arg0: i32, %arg1: i32) -> (i32, i32) {
    %c0_i32 = arith.constant 0 : i32
    %c0_i32_0 = arith.constant 0 : i32
    return %arg0, %c0_i32 : i32, i32
  }
}

</mosaic_0001>

<llo_original>
// kernel: simple_lstm_forward.2
$region0: #{simple_lstm_forward.2}
  #allocation0 [shape = 'u32[]', space=smem, size = 0x4, offset = 0x4, fixed_abs, tag = 'smem constant byte address 0x4 - core index']
  #allocation1 [shape = 'u32[144,128]{1,0:T(1,128)}', space=vmem, size = 0x12000, scoped, tag = 'internal scratch']
  %s0 = inlined_call_operand.vmem [shape: f32[128,32], index: 0, kind: input, shape index: {}]
  %s1 = inlined_call_operand.vmem [shape: f32[32,512], index: 1, kind: input, shape index: {}]
  %s2 = inlined_call_operand.vmem [shape: f32[1,512], index: 2, kind: input, shape index: {}]
  %s3 = inlined_call_operand.vmem [shape: f32[128,512], index: 3, kind: output, shape index: {}]
  %s4 = sld [smem:[#allocation0]]
  $region22: #{simple_lstm_forward.2} parent=0
    _
  %s6 = ssub.s32 1, %s4
  %s7 = scalar_select 0, %s6, %s4
  // Predicated region
  $region2: #{simple_lstm_forward.2} parent=0 // pred_check
    _
  $region3: #{simple_lstm_forward.2} parent=0 // pred_check_branch
    %9 = sbr.rel (0) target = $region5
  $region4: #{simple_lstm_forward.2} parent=0 // pred_region
    _
  $region5: #{simple_lstm_forward.2} parent=0 // pred_fallthru
    _
  // Predicated region
  $region6: #{simple_lstm_forward.2} parent=0 // pred_check
    _
  $region7: #{simple_lstm_forward.2} parent=0 // pred_check_branch
    %11 = sbr.rel (0) target = $region9
  $region8: #{simple_lstm_forward.2} parent=0 // pred_region
    _
  $region9: #{simple_lstm_forward.2} parent=0 // pred_fallthru
    _
  // Predicated region
  $region10: #{simple_lstm_forward.2} parent=0 // pred_check
    _
  $region11: #{simple_lstm_forward.2} parent=0 // pred_check_branch
    %13 = sbr.rel (0) target = $region13
  $region12: #{simple_lstm_forward.2} parent=0 // pred_region
    _
  $region13: #{simple_lstm_forward.2} parent=0 // pred_fallthru
    _
  %v14 = vld [vmem:[%s0] sm:$0xff]
  %v15 = vld [vmem:[%s0 + $0x8] sm:$0xff]
  %v16 = vld [vmem:[%s0 + $0x10] sm:$0xff]
  %v17 = vld [vmem:[%s0 + $0x18] sm:$0xff]
  %v18 = vld [vmem:[%s0 + $0x20] sm:$0xff]
  %v19 = vld [vmem:[%s0 + $0x28] sm:$0xff]
  %v20 = vld [vmem:[%s0 + $0x30] sm:$0xff]
  %v21 = vld [vmem:[%s0 + $0x38] sm:$0xff]
  %v22 = vld [vmem:[%s0 + $0x40] sm:$0xff]
  %v23 = vld [vmem:[%s0 + $0x48] sm:$0xff]
  %v24 = vld [vmem:[%s0 + $0x50] sm:$0xff]
  %v25 = vld [vmem:[%s0 + $0x58] sm:$0xff]
  %v26 = vld [vmem:[%s0 + $0x60] sm:$0xff]
  %v27 = vld [vmem:[%s0 + $0x68] sm:$0xff]
  %v28 = vld [vmem:[%s0 + $0x70] sm:$0xff]
  %v29 = vld [vmem:[%s0 + $0x78] sm:$0xff]
  %v30 = vld [vmem:[%s1] sm:$0xff]
  %v31 = vld [vmem:[%s1 + $0x8] sm:$0xff]
  %v32 = vld [vmem:[%s1 + $0x10] sm:$0xff]
  %v33 = vld [vmem:[%s1 + $0x18] sm:$0xff]
  %v34 = vld [vmem:[%s1 + $0x20] sm:$0xff]
  %v35 = vld [vmem:[%s1 + $0x28] sm:$0xff]
  %v36 = vld [vmem:[%s1 + $0x30] sm:$0xff]
  %v37 = vld [vmem:[%s1 + $0x38] sm:$0xff]
  %v38 = vld [vmem:[%s1 + $0x40] sm:$0xff]
  %v39 = vld [vmem:[%s1 + $0x48] sm:$0xff]
  %v40 = vld [vmem:[%s1 + $0x50] sm:$0xff]
  %v41 = vld [vmem:[%s1 + $0x58] sm:$0xff]
  %v42 = vld [vmem:[%s1 + $0x60] sm:$0xff]
  %v43 = vld [vmem:[%s1 + $0x68] sm:$0xff]
  %v44 = vld [vmem:[%s1 + $0x70] sm:$0xff]
  %v45 = vld [vmem:[%s1 + $0x78] sm:$0xff]
  %v46 = vld [vmem:[%s2] sm:$0xf]
  %v48 = vlaneseq
  %v49 = vshrl.u32 %v48, 7
  %v50 = vsub.s32 0, %v49
  %v51 = vrot.slane %v46, %v50
  %v52 = vlaneseq
  %v53 = vshrl.u32 %v52, 7
  %v54 = vsub.s32 1, %v53
  %v55 = vrot.slane %v46, %v54
  %v56 = vlaneseq
  %v57 = vshrl.u32 %v56, 7
  %v58 = vsub.s32 2, %v57
  %v59 = vrot.slane %v46, %v58
  %v60 = vlaneseq
  %v61 = vshrl.u32 %v60, 7
  %v62 = vsub.s32 3, %v61
  %v63 = vrot.slane %v46, %v62
  %vm68 = vcmask 261120
  %v70 = vsel %vm68, %v14, 0
  %v73 = vsel %vm68, %v15, 0
  %v76 = vsel %vm68, %v16, 0
  %v79 = vsel %vm68, %v17, 0
  %v82 = vsel %vm68, %v18, 0
  %v85 = vsel %vm68, %v19, 0
  %v88 = vsel %vm68, %v20, 0
  %v91 = vsel %vm68, %v21, 0
  %v94 = vsel %vm68, %v22, 0
  %v97 = vsel %vm68, %v23, 0
  %v100 = vsel %vm68, %v24, 0
  %v103 = vsel %vm68, %v25, 0
  %v106 = vsel %vm68, %v26, 0
  %v109 = vsel %vm68, %v27, 0
  %v112 = vsel %vm68, %v28, 0
  %v115 = vsel %vm68, %v29, 0
  %117 = vmatprep.subr.mxu0 %v31
  %118 = vmatpush1.msra.mxu0 %v30
  %119 = vmatprep.subr.mxu0 %v35
  %120 = vmatpush1.msra.mxu0 %v34
  %121 = vmatprep.subr.mxu0 %v39
  %122 = vmatpush1.msra.mxu0 %v38
  %123 = vmatprep.subr.mxu0 %v43
  %124 = vmatpush1.msra.mxu0 %v42
  %125 = vmatprep.subr.mxu0 0.0
  %126 = vmatpush1.msra.mxu0 0.0
  %127 = vmatprep.subr.mxu0 0.0
  %128 = vmatpush1.msra.mxu0 0.0
  %129 = vmatprep.subr.mxu0 0.0
  %130 = vmatpush1.msra.mxu0 0.0
  %131 = vmatprep.subr.mxu0 0.0
  %132 = vmatpush1.msra.mxu0 0.0
  %133 = vmatprep.subr.mxu0 0.0
  %134 = vmatpush1.msra.mxu0 0.0
  %135 = vmatprep.subr.mxu0 0.0
  %136 = vmatpush1.msra.mxu0 0.0
  %137 = vmatprep.subr.mxu0 0.0
  %138 = vmatpush1.msra.mxu0 0.0
  %139 = vmatprep.subr.mxu0 0.0
  %140 = vmatpush1.msra.mxu0 0.0
  %141 = vmatprep.subr.mxu0 0.0
  %142 = vmatpush1.msra.mxu0 0.0
  %143 = vmatprep.subr.mxu0 0.0
  %144 = vmatpush1.msra.mxu0 0.0
  %145 = vmatprep.subr.mxu0 0.0
  %146 = vmatpush1.msra.mxu0 0.0
  %147 = vmatprep.subr.mxu0 0.0
  %148 = vmatpush1.msra.mxu0 0.0
  %149 = vmatprep.subr.mxu0 0.0
  %150 = vmatpush1.msra.mxu0 0.0
  %151 = vmatprep.subr.mxu0 0.0
  %152 = vmatpush1.msra.mxu0 0.0
  %153 = vmatprep.subr.mxu0 0.0
  %154 = vmatpush1.msra.mxu0 0.0
  %155 = vmatprep.subr.mxu0 0.0
  %156 = vmatpush1.msra.mxu0 0.0
  %157 = vmatprep.subr.mxu0 0.0
  %158 = vmatpush1.msra.mxu0 0.0
  %159 = vmatprep.subr.mxu0 0.0
  %160 = vmatpush1.msra.mxu0 0.0
  %161 = vmatprep.subr.mxu0 0.0
  %162 = vmatpush1.msra.mxu0 0.0
  %163 = vmatprep.subr.mxu0 0.0
  %164 = vmatpush1.msra.mxu0 0.0
  %165 = vmatprep.subr.mxu0 0.0
  %166 = vmatpush1.msra.mxu0 0.0
  %167 = vmatprep.subr.mxu0 0.0
  %168 = vmatpush1.msra.mxu0 0.0
  %169 = vmatprep.subr.mxu0 0.0
  %170 = vmatpush1.msra.mxu0 0.0
  %171 = vmatprep.subr.mxu0 0.0
  %172 = vmatpush1.msra.mxu0 0.0
  %173 = vmatprep.subr.mxu0 0.0
  %174 = vmatpush1.msra.mxu0 0.0
  %175 = vmatprep.subr.mxu0 0.0
  %176 = vmatpush1.msra.mxu0 0.0
  %177 = vmatprep.subr.mxu0 0.0
  %178 = vmatpush1.msra.mxu0 0.0
  %179 = vmatprep.subr.mxu0 0.0
  %180 = vmatpush1.msra.mxu0 0.0
  %181 = vmatprep.mubr.f32.mxu0 0.0
  %182 = vmatmul.mubr.f32.gmra.mrb[0].mxu0 %v70
  %v183 = vpop.f32.mrb[0].mxu0
  %v184 = vadd.f32 %v51, %v183
  %v185 = vpop.f32.mrb[0].mxu0
  %v186 = vadd.f32 %v55, %v185
  %187 = vmatprep.mubr.f32.mxu0 0.0
  %188 = vmatmul.mubr.f32.gmra.mrb[0].mxu0 %v73
  %v189 = vpop.f32.mrb[0].mxu0
  %v190 = vadd.f32 %v51, %v189
  %v191 = vpop.f32.mrb[0].mxu0
  %v192 = vadd.f32 %v55, %v191
  %193 = vmatprep.mubr.f32.mxu0 0.0
  %194 = vmatmul.mubr.f32.gmra.mrb[0].mxu0 %v76
  %v195 = vpop.f32.mrb[0].mxu0
  %v196 = vadd.f32 %v51, %v195
  %v197 = vpop.f32.mrb[0].mxu0
  %v198 = vadd.f32 %v55, %v197
  %199 = vmatprep.mubr.f32.mxu0 0.0
  %200 = vmatmul.mubr.f32.gmra.mrb[0].mxu0 %v79
  %v201 = vpop.f32.mrb[0].mxu0
  %v202 = vadd.f32 %v51, %v201
  %v203 = vpop.f32.mrb[0].mxu0
  %v204 = vadd.f32 %v55, %v203
  %205 = vmatprep.mubr.f32.mxu0 0.0
  %206 = vmatmul.mubr.f32.gmra.mrb[0].mxu0 %v82
  %v207 = vpop.f32.mrb[0].mxu0
  %v208 = vadd.f32 %v51, %v207
  %v209 = vpop.f32.mrb[0].mxu0
  %v210 = vadd.f32 %v55, %v209
  %211 = vmatprep.mubr.f32.mxu0 0.0
  %212 = vmatmul.mubr.f32.gmra.mrb[0].mxu0 %v85
  %v213 = vpop.f32.mrb[0].mxu0
  %v214 = vadd.f32 %v51, %v213
  %v215 = vpop.f32.mrb[0].mxu0
  %v216 = vadd.f32 %v55, %v215
  %217 = vmatprep.mubr.f32.mxu0 0.0
  %218 = vmatmul.mubr.f32.gmra.mrb[0].mxu0 %v88
  %v219 = vpop.f32.mrb[0].mxu0
  %v220 = vadd.f32 %v51, %v219
  %v221 = vpop.f32.mrb[0].mxu0
  %v222 = vadd.f32 %v55, %v221
  %223 = vmatprep.mubr.f32.mxu0 0.0
  %224 = vmatmul.mubr.f32.gmra.mrb[0].mxu0 %v91
  %v225 = vpop.f32.mrb[0].mxu0
  %v226 = vadd.f32 %v51, %v225
  %v227 = vpop.f32.mrb[0].mxu0
  %v228 = vadd.f32 %v55, %v227
  %229 = vmatprep.mubr.f32.mxu0 0.0
  %230 = vmatmul.mubr.f32.gmra.mrb[0].mxu0 %v94
  %v231 = vpop.f32.mrb[0].mxu0
  %v232 = vadd.f32 %v51, %v231
  %v233 = vpop.f32.mrb[0].mxu0
  %v234 = vadd.f32 %v55, %v233
  %235 = vmatprep.mubr.f32.mxu0 0.0
  %236 = vmatmul.mubr.f32.gmra.mrb[0].mxu0 %v97
  %v237 = vpop.f32.mrb[0].mxu0
  %v238 = vadd.f32 %v51, %v237
  %v239 = vpop.f32.mrb[0].mxu0
  %v240 = vadd.f32 %v55, %v239
  %241 = vmatprep.mubr.f32.mxu0 0.0
  %242 = vmatmul.mubr.f32.gmra.mrb[0].mxu0 %v100
  %v243 = vpop.f32.mrb[0].mxu0
  %v244 = vadd.f32 %v51, %v243
  %v245 = vpop.f32.mrb[0].mxu0
  %v246 = vadd.f32 %v55, %v245
  %247 = vmatprep.mubr.f32.mxu0 0.0
  %248 = vmatmul.mubr.f32.gmra.mrb[0].mxu0 %v103
  %v249 = vpop.f32.mrb[0].mxu0
  %v250 = vadd.f32 %v51, %v249
  %v251 = vpop.f32.mrb[0].mxu0
  %v252 = vadd.f32 %v55, %v251
  %253 = vmatprep.mubr.f32.mxu0 0.0
  %254 = vmatmul.mubr.f32.gmra.mrb[0].mxu0 %v106
  %v255 = vpop.f32.mrb[0].mxu0
  %v256 = vadd.f32 %v51, %v255
  %v257 = vpop.f32.mrb[0].mxu0
  %v258 = vadd.f32 %v55, %v257
  %259 = vmatprep.mubr.f32.mxu0 0.0
  %260 = vmatmul.mubr.f32.gmra.mrb[0].mxu0 %v109
  %v261 = vpop.f32.mrb[0].mxu0
  %v262 = vadd.f32 %v51, %v261
  %v263 = vpop.f32.mrb[0].mxu0
  %v264 = vadd.f32 %v55, %v263
  %265 = vmatprep.mubr.f32.mxu0 0.0
  %266 = vmatmul.mubr.f32.gmra.mrb[0].mxu0 %v112
  %v267 = vpop.f32.mrb[0].mxu0
  %v268 = vadd.f32 %v51, %v267
  %v269 = vpop.f32.mrb[0].mxu0
  %v270 = vadd.f32 %v55, %v269
  %271 = vmatprep.mubr.f32.mxu0 0.0
  %272 = vmatmul.mubr.f32.gmra.mrb[0].mxu0 %v115
  %v273 = vpop.f32.mrb[0].mxu0
  %v274 = vadd.f32 %v51, %v273
  %v275 = vpop.f32.mrb[0].mxu0
  %v276 = vadd.f32 %v55, %v275
  %277 = vdwg.mxu0
  %278 = vmatprep.subr.mxu0 %v33
  %279 = vmatpush1.msra.mxu0 %v32
  %280 = vmatprep.subr.mxu0 %v37
  %281 = vmatpush1.msra.mxu0 %v36
  %282 = vmatprep.subr.mxu0 %v41
  %283 = vmatpush1.msra.mxu0 %v40
  %284 = vmatprep.subr.mxu0 %v45
  %285 = vmatpush1.msra.mxu0 %v44
  %286 = vmatprep.subr.mxu0 0.0
  %287 = vmatpush1.msra.mxu0 0.0
  %288 = vmatprep.subr.mxu0 0.0
  %289 = vmatpush1.msra.mxu0 0.0
  %290 = vmatprep.subr.mxu0 0.0
  %291 = vmatpush1.msra.mxu0 0.0
  %292 = vmatprep.subr.mxu0 0.0
  %293 = vmatpush1.msra.mxu0 0.0
  %294 = vmatprep.subr.mxu0 0.0
  %295 = vmatpush1.msra.mxu0 0.0
  %296 = vmatprep.subr.mxu0 0.0
  %297 = vmatpush1.msra.mxu0 0.0
  %298 = vmatprep.subr.mxu0 0.0
  %299 = vmatpush1.msra.mxu0 0.0
  %300 = vmatprep.subr.mxu0 0.0
  %301 = vmatpush1.msra.mxu0 0.0
  %302 = vmatprep.subr.mxu0 0.0
  %303 = vmatpush1.msra.mxu0 0.0
  %304 = vmatprep.subr.mxu0 0.0
  %305 = vmatpush1.msra.mxu0 0.0
  %306 = vmatprep.subr.mxu0 0.0
  %307 = vmatpush1.msra.mxu0 0.0
  %308 = vmatprep.subr.mxu0 0.0
  %309 = vmatpush1.msra.mxu0 0.0
  %310 = vmatprep.subr.mxu0 0.0
  %311 = vmatpush1.msra.mxu0 0.0
  %312 = vmatprep.subr.mxu0 0.0
  %313 = vmatpush1.msra.mxu0 0.0
  %314 = vmatprep.subr.mxu0 0.0
  %315 = vmatpush1.msra.mxu0 0.0
  %316 = vmatprep.subr.mxu0 0.0
  %317 = vmatpush1.msra.mxu0 0.0
  %318 = vmatprep.subr.mxu0 0.0
  %319 = vmatpush1.msra.mxu0 0.0
  %320 = vmatprep.subr.mxu0 0.0
  %321 = vmatpush1.msra.mxu0 0.0
  %322 = vmatprep.subr.mxu0 0.0
  %323 = vmatpush1.msra.mxu0 0.0
  %324 = vmatprep.subr.mxu0 0.0
  %325 = vmatpush1.msra.mxu0 0.0
  %326 = vmatprep.subr.mxu0 0.0
  %327 = vmatpush1.msra.mxu0 0.0
  %328 = vmatprep.subr.mxu0 0.0
  %329 = vmatpush1.msra.mxu0 0.0
  %330 = vmatprep.subr.mxu0 0.0
  %331 = vmatpush1.msra.mxu0 0.0
  %332 = vmatprep.subr.mxu0 0.0
  %333 = vmatpush1.msra.mxu0 0.0
  %334 = vmatprep.subr.mxu0 0.0
  %335 = vmatpush1.msra.mxu0 0.0
  %336 = vmatprep.subr.mxu0 0.0
  %337 = vmatpush1.msra.mxu0 0.0
  %338 = vmatprep.subr.mxu0 0.0
  %339 = vmatpush1.msra.mxu0 0.0
  %340 = vmatprep.subr.mxu0 0.0
  %341 = vmatpush1.msra.mxu0 0.0
  %342 = vmatprep.mubr.f32.mxu0 0.0
  %343 = vmatmul.mubr.f32.gmra.mrb[0].mxu0 %v70
  %v344 = vpop.f32.mrb[0].mxu0
  %v345 = vadd.f32 %v59, %v344
  %v346 = vpop.f32.mrb[0].mxu0
  %v347 = vadd.f32 %v63, %v346
  %348 = vmatprep.mubr.f32.mxu0 0.0
  %349 = vmatmul.mubr.f32.gmra.mrb[0].mxu0 %v73
  %v350 = vpop.f32.mrb[0].mxu0
  %v351 = vadd.f32 %v59, %v350
  %v352 = vpop.f32.mrb[0].mxu0
  %v353 = vadd.f32 %v63, %v352
  %354 = vmatprep.mubr.f32.mxu0 0.0
  %355 = vmatmul.mubr.f32.gmra.mrb[0].mxu0 %v76
  %v356 = vpop.f32.mrb[0].mxu0
  %v357 = vadd.f32 %v59, %v356
  %v358 = vpop.f32.mrb[0].mxu0
  %v359 = vadd.f32 %v63, %v358
  %360 = vmatprep.mubr.f32.mxu0 0.0
  %361 = vmatmul.mubr.f32.gmra.mrb[0].mxu0 %v79
  %v362 = vpop.f32.mrb[0].mxu0
  %v363 = vadd.f32 %v59, %v362
  %v364 = vpop.f32.mrb[0].mxu0
  %v365 = vadd.f32 %v63, %v364
  %366 = vmatprep.mubr.f32.mxu0 0.0
  %367 = vmatmul.mubr.f32.gmra.mrb[0].mxu0 %v82
  %v368 = vpop.f32.mrb[0].mxu0
  %v369 = vadd.f32 %v59, %v368
  %v370 = vpop.f32.mrb[0].mxu0
  %v371 = vadd.f32 %v63, %v370
  %372 = vmatprep.mubr.f32.mxu0 0.0
  %373 = vmatmul.mubr.f32.gmra.mrb[0].mxu0 %v85
  %v374 = vpop.f32.mrb[0].mxu0
  %v375 = vadd.f32 %v59, %v374
  %v376 = vpop.f32.mrb[0].mxu0
  %v377 = vadd.f32 %v63, %v376
  %378 = vmatprep.mubr.f32.mxu0 0.0
  %379 = vmatmul.mubr.f32.gmra.mrb[0].mxu0 %v88
  %v380 = vpop.f32.mrb[0].mxu0
  %v381 = vadd.f32 %v59, %v380
  %v382 = vpop.f32.mrb[0].mxu0
  %v383 = vadd.f32 %v63, %v382
  %384 = vmatprep.mubr.f32.mxu0 0.0
  %385 = vmatmul.mubr.f32.gmra.mrb[0].mxu0 %v91
  %v386 = vpop.f32.mrb[0].mxu0
  %v387 = vadd.f32 %v59, %v386
  %v388 = vpop.f32.mrb[0].mxu0
  %v389 = vadd.f32 %v63, %v388
  %390 = vmatprep.mubr.f32.mxu0 0.0
  %391 = vmatmul.mubr.f32.gmra.mrb[0].mxu0 %v94
  %v392 = vpop.f32.mrb[0].mxu0
  %v393 = vadd.f32 %v59, %v392
  %v394 = vpop.f32.mrb[0].mxu0
  %v395 = vadd.f32 %v63, %v394
  %396 = vmatprep.mubr.f32.mxu0 0.0
  %397 = vmatmul.mubr.f32.gmra.mrb[0].mxu0 %v97
  %v398 = vpop.f32.mrb[0].mxu0
  %v399 = vadd.f32 %v59, %v398
  %v400 = vpop.f32.mrb[0].mxu0
  %v401 = vadd.f32 %v63, %v400
  %402 = vmatprep.mubr.f32.mxu0 0.0
  %403 = vmatmul.mubr.f32.gmra.mrb[0].mxu0 %v100
  %v404 = vpop.f32.mrb[0].mxu0
  %v405 = vadd.f32 %v59, %v404
  %v406 = vpop.f32.mrb[0].mxu0
  %v407 = vadd.f32 %v63, %v406
  %408 = vmatprep.mubr.f32.mxu0 0.0
  %409 = vmatmul.mubr.f32.gmra.mrb[0].mxu0 %v103
  %v410 = vpop.f32.mrb[0].mxu0
  %v411 = vadd.f32 %v59, %v410
  %v412 = vpop.f32.mrb[0].mxu0
  %v413 = vadd.f32 %v63, %v412
  %414 = vmatprep.mubr.f32.mxu0 0.0
  %415 = vmatmul.mubr.f32.gmra.mrb[0].mxu0 %v106
  %v416 = vpop.f32.mrb[0].mxu0
  %v417 = vadd.f32 %v59, %v416
  %v418 = vpop.f32.mrb[0].mxu0
  %v419 = vadd.f32 %v63, %v418
  %420 = vmatprep.mubr.f32.mxu0 0.0
  %421 = vmatmul.mubr.f32.gmra.mrb[0].mxu0 %v109
  %v422 = vpop.f32.mrb[0].mxu0
  %v423 = vadd.f32 %v59, %v422
  %v424 = vpop.f32.mrb[0].mxu0
  %v425 = vadd.f32 %v63, %v424
  %426 = vmatprep.mubr.f32.mxu0 0.0
  %427 = vmatmul.mubr.f32.gmra.mrb[0].mxu0 %v112
  %v428 = vpop.f32.mrb[0].mxu0
  %v429 = vadd.f32 %v59, %v428
  %v430 = vpop.f32.mrb[0].mxu0
  %v431 = vadd.f32 %v63, %v430
  %432 = vmatprep.mubr.f32.mxu0 0.0
  %433 = vmatmul.mubr.f32.gmra.mrb[0].mxu0 %v115
  %v434 = vpop.f32.mrb[0].mxu0
  %v435 = vadd.f32 %v59, %v434
  %v436 = vpop.f32.mrb[0].mxu0
  %v437 = vadd.f32 %v63, %v436
  %438 = vdwg.mxu0
  %439 = vst [vmem:[%s3] sm:$0xff] %v184
  %440 = vst [vmem:[%s3 + $0x8] sm:$0xff] %v186
  %441 = vst [vmem:[%s3 + $0x10] sm:$0xff] %v345
  %442 = vst [vmem:[%s3 + $0x18] sm:$0xff] %v347
  %443 = vst [vmem:[%s3 + $0x20] sm:$0xff] %v190
  %444 = vst [vmem:[%s3 + $0x28] sm:$0xff] %v192
  %445 = vst [vmem:[%s3 + $0x30] sm:$0xff] %v351
  %446 = vst [vmem:[%s3 + $0x38] sm:$0xff] %v353
  %447 = vst [vmem:[%s3 + $0x40] sm:$0xff] %v196
  %448 = vst [vmem:[%s3 + $0x48] sm:$0xff] %v198
  %449 = vst [vmem:[%s3 + $0x50] sm:$0xff] %v357
  %450 = vst [vmem:[%s3 + $0x58] sm:$0xff] %v359
  %451 = vst [vmem:[%s3 + $0x60] sm:$0xff] %v202
  %452 = vst [vmem:[%s3 + $0x68] sm:$0xff] %v204
  %453 = vst [vmem:[%s3 + $0x70] sm:$0xff] %v363
  %454 = vst [vmem:[%s3 + $0x78] sm:$0xff] %v365
  %455 = vst [vmem:[%s3 + $0x80] sm:$0xff] %v208
  %456 = vst [vmem:[%s3 + $0x88] sm:$0xff] %v210
  %457 = vst [vmem:[%s3 + $0x90] sm:$0xff] %v369
  %458 = vst [vmem:[%s3 + $0x98] sm:$0xff] %v371
  %459 = vst [vmem:[%s3 + $0xa0] sm:$0xff] %v214
  %460 = vst [vmem:[%s3 + $0xa8] sm:$0xff] %v216
  %461 = vst [vmem:[%s3 + $0xb0] sm:$0xff] %v375
  %462 = vst [vmem:[%s3 + $0xb8] sm:$0xff] %v377
  %463 = vst [vmem:[%s3 + $0xc0] sm:$0xff] %v220
  %464 = vst [vmem:[%s3 + $0xc8] sm:$0xff] %v222
  %465 = vst [vmem:[%s3 + $0xd0] sm:$0xff] %v381
  %466 = vst [vmem:[%s3 + $0xd8] sm:$0xff] %v383
  %467 = vst [vmem:[%s3 + $0xe0] sm:$0xff] %v226
  %468 = vst [vmem:[%s3 + $0xe8] sm:$0xff] %v228
  %469 = vst [vmem:[%s3 + $0xf0] sm:$0xff] %v387
  %470 = vst [vmem:[%s3 + $0xf8] sm:$0xff] %v389
  %471 = vst [vmem:[%s3 + $0x100] sm:$0xff] %v232
  %472 = vst [vmem:[%s3 + $0x108] sm:$0xff] %v234
  %473 = vst [vmem:[%s3 + $0x110] sm:$0xff] %v393
  %474 = vst [vmem:[%s3 + $0x118] sm:$0xff] %v395
  %475 = vst [vmem:[%s3 + $0x120] sm:$0xff] %v238
  %476 = vst [vmem:[%s3 + $0x128] sm:$0xff] %v240
  %477 = vst [vmem:[%s3 + $0x130] sm:$0xff] %v399
  %478 = vst [vmem:[%s3 + $0x138] sm:$0xff] %v401
  %479 = vst [vmem:[%s3 + $0x140] sm:$0xff] %v244
  %480 = vst [vmem:[%s3 + $0x148] sm:$0xff] %v246
  %481 = vst [vmem:[%s3 + $0x150] sm:$0xff] %v405
  %482 = vst [vmem:[%s3 + $0x158] sm:$0xff] %v407
  %483 = vst [vmem:[%s3 + $0x160] sm:$0xff] %v250
  %484 = vst [vmem:[%s3 + $0x168] sm:$0xff] %v252
  %485 = vst [vmem:[%s3 + $0x170] sm:$0xff] %v411
  %486 = vst [vmem:[%s3 + $0x178] sm:$0xff] %v413
  %487 = vst [vmem:[%s3 + $0x180] sm:$0xff] %v256
  %488 = vst [vmem:[%s3 + $0x188] sm:$0xff] %v258
  %489 = vst [vmem:[%s3 + $0x190] sm:$0xff] %v417
  %490 = vst [vmem:[%s3 + $0x198] sm:$0xff] %v419
  %491 = vst [vmem:[%s3 + $0x1a0] sm:$0xff] %v262
  %492 = vst [vmem:[%s3 + $0x1a8] sm:$0xff] %v264
  %493 = vst [vmem:[%s3 + $0x1b0] sm:$0xff] %v423
  %494 = vst [vmem:[%s3 + $0x1b8] sm:$0xff] %v425
  %495 = vst [vmem:[%s3 + $0x1c0] sm:$0xff] %v268
  %496 = vst [vmem:[%s3 + $0x1c8] sm:$0xff] %v270
  %497 = vst [vmem:[%s3 + $0x1d0] sm:$0xff] %v429
  %498 = vst [vmem:[%s3 + $0x1d8] sm:$0xff] %v431
  %499 = vst [vmem:[%s3 + $0x1e0] sm:$0xff] %v274
  %500 = vst [vmem:[%s3 + $0x1e8] sm:$0xff] %v276
  %501 = vst [vmem:[%s3 + $0x1f0] sm:$0xff] %v435
  %502 = vst [vmem:[%s3 + $0x1f8] sm:$0xff] %v437
  // Predicated region
  $region14: #{simple_lstm_forward.2} parent=0 // pred_check
    _
  $region15: #{simple_lstm_forward.2} parent=0 // pred_check_branch
    %504 = sbr.rel (0) target = $region17
  $region16: #{simple_lstm_forward.2} parent=0 // pred_region
    _
  $region17: #{simple_lstm_forward.2} parent=0 // pred_fallthru
    _
  // Predicated region
  $region18: #{simple_lstm_forward.2} parent=0 // pred_check
    _
  $region19: #{simple_lstm_forward.2} parent=0 // pred_check_branch
    %506 = sbr.rel (0) target = $region21
  $region20: #{simple_lstm_forward.2} parent=0 // pred_region
    _
  $region21: #{simple_lstm_forward.2} parent=0 // pred_fallthru
    _

// kernel: simple_lstm_forward.3
$region0: #{simple_lstm_forward.3}
  #allocation0 [shape = 'u32[]', space=smem, size = 0x4, offset = 0x4, fixed_abs, tag = 'smem constant byte address 0x4 - core index']
  #allocation1 [shape = 'u32[144,128]{1,0:T(1,128)}', space=vmem, size = 0x12000, scoped, tag = 'internal scratch']
  #allocation2 [shape = 'f32[8,128]{1,0:T(8,128)}', space=vmem, size = 0x1000, scoped, tag = 'scratch operand']
  #allocation3 [shape = 'f32[8,128]{1,0:T(8,128)}', space=vmem, size = 0x1000, scoped, tag = 'scratch operand']
  %s0 = inlined_call_operand.vmem [shape: f32[8,16,512], index: 0, kind: input, shape index: {}]
  %s1 = inlined_call_operand.vmem [shape: f32[128,512], index: 1, kind: input, shape index: {}]
  %s2 = inlined_call_operand.vmem [shape: f32[16,128], index: 2, kind: output, shape index: {}]
  %s3 = sld [smem:[#allocation0]]
  $region72: #{simple_lstm_forward.3} parent=0
    _
  %s5 = ssub.s32 1, %s3
  %s6 = scalar_select 0, %s5, %s3
  $region1: #{simple_lstm_forward.3} parent=0
    #allocation4 [shape = 'u8[262144]{0}', space=vmem, size = 0x40000, scoped, tag = 'input window, operand 0']
    loop: start=0, step=1, limit=4
    $region2: #{simple_lstm_forward.3} parent=1 // loop_pre_header
      _
    $region3: #{simple_lstm_forward.3} parent=1 // loop_header
      %s8 = sphi 0, %s12
      %p9 = scmp.ge.s32.totalorder %s8, 4
      %s15 = sphi 0, %s27
      %s16 = sphi 0, %s23
      %s17 = sphi 0, %s15
      %s18 = sphi 0, %s16
      %s19 = sphi 0, %s17
      %s20 = sphi 0, %s18
      %s32 = sphi 0, %s34
      %s35 = sphi 0, %s32
      %s36 = sphi 0, %s35
      %s52 = sphi 0, %s36
      %s56 = sphi 0, %s56
      %s58 = sphi 0, %s56
      %s59 = sphi 0, %s58
      %s73 = sphi 0, %s59
      %s79 = sphi 0, %s81
      %s82 = sphi 0, %s79
      %s83 = sphi 0, %s82
      %s99 = sphi 0, %s83
    $region4: #{simple_lstm_forward.3} parent=1 // loop_header_branch
      %11 = sbr.rel (%p9) target = $region8
    $region5: #{simple_lstm_forward.3} parent=1 // loop_body
      %s13 = ssub.s32 %s8, 1
      %s14 = ssub.s32 %s8, 2
      %s21 = sadd.s32 1, %s16
      %p22 = scmp.ge.s32.totalorder %s21, 1
      %s23 = scalar_select %p22, 0, %s21
      %s24 = sadd.s32 1, %s15
      %s25 = scalar_select %p22, %s24, %s15
      %p26 = scmp.ge.s32.totalorder %s25, 2
      %s27 = scalar_select %p26, 0, %s25
      %s28 = ssub.s32 %s16, %s23
      %s29 = ssub.s32 %s15, %s27
      %s30 = sor.u32 %s28, %s29
      %p31 = scmp.eq.s32.totalorder %s30, 0
      %s33 = sadd.s32 %s32, 1
      %s34 = scalar_select %p31, %s32, %s33
      %p37 = pneg %p31
      %p38 = scmp.eq.s32.totalorder %s8, 1
      %p39 = por %p37, %p38
      %p40 = scmp.ne.s32.totalorder %s32, %s35
      %p41 = scmp.eq.s32.totalorder %s8, 0
      %p42 = por %p40, %p41
      %p43 = scmp.ne.s32.totalorder %s32, %s35
      %p44 = scmp.eq.s32.totalorder %s13, 1
      %p45 = por %p43, %p44
      %p46 = scmp.ne.s32.totalorder %s35, %s36
      %p47 = scmp.eq.s32.totalorder %s13, 0
      %p48 = por %p46, %p47
      %p49 = scmp.ne.s32.totalorder %s35, %s36
      %p50 = scmp.eq.s32.totalorder %s14, 1
      %p51 = por %p49, %p50
      %p53 = scmp.ne.s32.totalorder %s36, %s52
      %p54 = scmp.eq.s32.totalorder %s14, 0
      %p55 = por %p53, %p54
      %s57 = sadd.s32 %s56, 1
      %p60 = scmp.eq.s32.totalorder %s8, 1
      %p61 = scmp.ne.s32.totalorder %s56, %s58
      %p62 = scmp.eq.s32.totalorder %s8, 0
      %p63 = por %p61, %p62
      %p64 = scmp.ne.s32.totalorder %s56, %s58
      %p65 = scmp.eq.s32.totalorder %s13, 1
      %p66 = por %p64, %p65
      %p67 = scmp.ne.s32.totalorder %s58, %s59
      %p68 = scmp.eq.s32.totalorder %s13, 0
      %p69 = por %p67, %p68
      %p70 = scmp.ne.s32.totalorder %s58, %s59
      %p71 = scmp.eq.s32.totalorder %s14, 1
      %p72 = por %p70, %p71
      %p74 = scmp.ne.s32.totalorder %s59, %s73
      %p75 = scmp.eq.s32.totalorder %s14, 0
      %p76 = por %p74, %p75
      %s77 = ssub.s32 %s15, %s27
      %p78 = scmp.eq.s32.totalorder %s77, 0
      %s80 = sadd.s32 %s79, 1
      %s81 = scalar_select %p78, %s79, %s80
      %p84 = pneg %p78
      %p85 = scmp.eq.s32.totalorder %s8, 1
      %p86 = por %p84, %p85
      %p87 = scmp.ne.s32.totalorder %s79, %s82
      %p88 = scmp.eq.s32.totalorder %s8, 0
      %p89 = por %p87, %p88
      %p90 = scmp.ne.s32.totalorder %s79, %s82
      %p91 = scmp.eq.s32.totalorder %s13, 1
      %p92 = por %p90, %p91
      %p93 = scmp.ne.s32.totalorder %s82, %s83
      %p94 = scmp.eq.s32.totalorder %s13, 0
      %p95 = por %p93, %p94
      %p96 = scmp.ne.s32.totalorder %s82, %s83
      %p97 = scmp.eq.s32.totalorder %s14, 1
      %p98 = por %p96, %p97
      %p100 = scmp.ne.s32.totalorder %s83, %s99
      %p101 = scmp.eq.s32.totalorder %s14, 0
      %p102 = por %p100, %p101
      %p103 = scmp.le.s32.totalorder 1, %s8
      %p104 = scmp.lt.s32.totalorder %s8, 3
      %p105 = pnand %p103, %p104
      %p106 = pneg %p105
      // Predicated region
      $region9: #{simple_lstm_forward.3} parent=5 // pred_check
        _
      $region10: #{simple_lstm_forward.3} parent=5 // pred_check_branch
        %108 = sbr.rel (%p105) target = $region12
      $region11: #{simple_lstm_forward.3} parent=5 // pred_region
        %s109 = ssub.s32 %s8, 1
        // Predicated region
        $region13: #{simple_lstm_forward.3} parent=11 // pred_check
          %p110 = pneg %p69
        $region14: #{simple_lstm_forward.3} parent=11 // pred_check_branch
          %112 = sbr.rel (%p110) target = $region16
        $region15: #{simple_lstm_forward.3} parent=11 // pred_region
          _
        $region16: #{simple_lstm_forward.3} parent=11 // pred_fallthru
          _
      $region12: #{simple_lstm_forward.3} parent=5 // pred_fallthru
        _
      %p113 = scmp.lt.s32.totalorder %s8, 2
      // Predicated region
      $region17: #{simple_lstm_forward.3} parent=5 // pred_check
        %p114 = pneg %p113
      $region18: #{simple_lstm_forward.3} parent=5 // pred_check_branch
        %116 = sbr.rel (%p114) target = $region20
      $region19: #{simple_lstm_forward.3} parent=5 // pred_region
        // Predicated region
        $region21: #{simple_lstm_forward.3} parent=19 // pred_check
          %p117 = pneg %p42
        $region22: #{simple_lstm_forward.3} parent=19 // pred_check_branch
          %119 = sbr.rel (%p117) target = $region24
        $region23: #{simple_lstm_forward.3} parent=19 // pred_region
          %s120 = sand.u32 %s32, 1
          %s121 = sand.u32 %s32, 1
          %s122 = smul.addr %s121, 256
          %s123 = scalar_lea.vmem [#allocation4], %s122
          %s124 = smul.u32 8, %s16
          %s125 = smul.addr %s15, 4
          %s126 = smul.addr %s124, 8
          %s127 = sadd.s32 %s125, %s126
          %s128 = smul.addr %s127, 8
          %s129 = scalar_lea.vmem %s0, %s128
          // Predicated region
          $region25: #{simple_lstm_forward.3} parent=23 // pred_check
            _
          $region26: #{simple_lstm_forward.3} parent=23 // pred_check_branch
            %131 = sbr.rel (0) target = $region28
          $region27: #{simple_lstm_forward.3} parent=23 // pred_region
            // Predicated region
            $region29: #{simple_lstm_forward.3} parent=27 // pred_check
              _
            $region30: #{simple_lstm_forward.3} parent=27 // pred_check_branch
              %133 = sbr.rel (0) target = $region32
            $region31: #{simple_lstm_forward.3} parent=27 // pred_region
              loop: start=0, step=1, limit=1
              $region33: #{simple_lstm_forward.3} parent=31 // loop_pre_header
                _
              $region34: #{simple_lstm_forward.3} parent=31 // loop_header
                %s135 = sphi 0, %s139
                %p136 = scmp.ge.s32.totalorder %s135, 1
                %s140 = sphi %s129, %s129
                %s141 = sphi %s123, %s123
              $region35: #{simple_lstm_forward.3} parent=31 // loop_header_branch
                %138 = sbr.rel (%p136) target = $region39
              $region36: #{simple_lstm_forward.3} parent=31 // loop_body
                %v142 = vld [vmem:[%s140] sm:$0xff]
                %143 = vst [vmem:[%s141] sm:$0xff] %v142
                %v144 = vld [vmem:[%s140 + $0x8] sm:$0xff]
                %145 = vst [vmem:[%s141 + $0x8] sm:$0xff] %v144
                %v146 = vld [vmem:[%s140 + $0x10] sm:$0xff]
                %147 = vst [vmem:[%s141 + $0x10] sm:$0xff] %v146
                %v148 = vld [vmem:[%s140 + $0x18] sm:$0xff]
                %149 = vst [vmem:[%s141 + $0x18] sm:$0xff] %v148
                %v150 = vld [vmem:[%s140 + $0x40] sm:$0xff]
                %151 = vst [vmem:[%s141 + $0x20] sm:$0xff] %v150
                %v152 = vld [vmem:[%s140 + $0x48] sm:$0xff]
                %153 = vst [vmem:[%s141 + $0x28] sm:$0xff] %v152
                %v154 = vld [vmem:[%s140 + $0x50] sm:$0xff]
                %155 = vst [vmem:[%s141 + $0x30] sm:$0xff] %v154
                %v156 = vld [vmem:[%s140 + $0x58] sm:$0xff]
                %157 = vst [vmem:[%s141 + $0x38] sm:$0xff] %v156
                %v158 = vld [vmem:[%s140 + $0x80] sm:$0xff]
                %159 = vst [vmem:[%s141 + $0x40] sm:$0xff] %v158
                %v160 = vld [vmem:[%s140 + $0x88] sm:$0xff]
                %161 = vst [vmem:[%s141 + $0x48] sm:$0xff] %v160
                %v162 = vld [vmem:[%s140 + $0x90] sm:$0xff]
                %163 = vst [vmem:[%s141 + $0x50] sm:$0xff] %v162
                %v164 = vld [vmem:[%s140 + $0x98] sm:$0xff]
                %165 = vst [vmem:[%s141 + $0x58] sm:$0xff] %v164
                %v166 = vld [vmem:[%s140 + $0xc0] sm:$0xff]
                %167 = vst [vmem:[%s141 + $0x60] sm:$0xff] %v166
                %v168 = vld [vmem:[%s140 + $0xc8] sm:$0xff]
                %169 = vst [vmem:[%s141 + $0x68] sm:$0xff] %v168
                %v170 = vld [vmem:[%s140 + $0xd0] sm:$0xff]
                %171 = vst [vmem:[%s141 + $0x70] sm:$0xff] %v170
                %v172 = vld [vmem:[%s140 + $0xd8] sm:$0xff]
                %173 = vst [vmem:[%s141 + $0x78] sm:$0xff] %v172
                %v174 = vld [vmem:[%s140 + $0x100] sm:$0xff]
                %175 = vst [vmem:[%s141 + $0x80] sm:$0xff] %v174
                %v176 = vld [vmem:[%s140 + $0x108] sm:$0xff]
                %177 = vst [vmem:[%s141 + $0x88] sm:$0xff] %v176
                %v178 = vld [vmem:[%s140 + $0x110] sm:$0xff]
                %179 = vst [vmem:[%s141 + $0x90] sm:$0xff] %v178
                %v180 = vld [vmem:[%s140 + $0x118] sm:$0xff]
                %181 = vst [vmem:[%s141 + $0x98] sm:$0xff] %v180
                %v182 = vld [vmem:[%s140 + $0x140] sm:$0xff]
                %183 = vst [vmem:[%s141 + $0xa0] sm:$0xff] %v182
                %v184 = vld [vmem:[%s140 + $0x148] sm:$0xff]
                %185 = vst [vmem:[%s141 + $0xa8] sm:$0xff] %v184
                %v186 = vld [vmem:[%s140 + $0x150] sm:$0xff]
                %187 = vst [vmem:[%s141 + $0xb0] sm:$0xff] %v186
                %v188 = vld [vmem:[%s140 + $0x158] sm:$0xff]
                %189 = vst [vmem:[%s141 + $0xb8] sm:$0xff] %v188
                %v190 = vld [vmem:[%s140 + $0x180] sm:$0xff]
                %191 = vst [vmem:[%s141 + $0xc0] sm:$0xff] %v190
                %v192 = vld [vmem:[%s140 + $0x188] sm:$0xff]
                %193 = vst [vmem:[%s141 + $0xc8] sm:$0xff] %v192
                %v194 = vld [vmem:[%s140 + $0x190] sm:$0xff]
                %195 = vst [vmem:[%s141 + $0xd0] sm:$0xff] %v194
                %v196 = vld [vmem:[%s140 + $0x198] sm:$0xff]
                %197 = vst [vmem:[%s141 + $0xd8] sm:$0xff] %v196
                %v198 = vld [vmem:[%s140 + $0x1c0] sm:$0xff]
                %199 = vst [vmem:[%s141 + $0xe0] sm:$0xff] %v198
                %v200 = vld [vmem:[%s140 + $0x1c8] sm:$0xff]
                %201 = vst [vmem:[%s141 + $0xe8] sm:$0xff] %v200
                %v202 = vld [vmem:[%s140 + $0x1d0] sm:$0xff]
                %203 = vst [vmem:[%s141 + $0xf0] sm:$0xff] %v202
                %v204 = vld [vmem:[%s140 + $0x1d8] sm:$0xff]
                %205 = vst [vmem:[%s141 + $0xf8] sm:$0xff] %v204
              $region37: #{simple_lstm_forward.3} parent=31 // loop_footer
                %s139 = sadd.s32 1, %s135
              $region38: #{simple_lstm_forward.3} parent=31 // loop_footer_branch
                %134 = sbr.rel target = $region34
              $region39: #{simple_lstm_forward.3} parent=31 // loop_exit
                _
            $region32: #{simple_lstm_forward.3} parent=27 // pred_fallthru
              _
            // Predicated region
            $region40: #{simple_lstm_forward.3} parent=27 // pred_check
              _
            $region41: #{simple_lstm_forward.3} parent=27 // pred_check_branch
              %207 = sbr.rel target = $region43
            $region42: #{simple_lstm_forward.3} parent=27 // pred_region
              _
            $region43: #{simple_lstm_forward.3} parent=27 // pred_fallthru
              _
          $region28: #{simple_lstm_forward.3} parent=23 // pred_fallthru
            _
          %208 = vnop
        $region24: #{simple_lstm_forward.3} parent=19 // pred_fallthru
          _
      $region20: #{simple_lstm_forward.3} parent=5 // pred_fallthru
        _
      %p209 = scmp.le.s32.totalorder 1, %s8
      %p210 = scmp.lt.s32.totalorder %s8, 3
      %p211 = pnand %p209, %p210
      %p212 = pneg %p211
      // Predicated region
      $region44: #{simple_lstm_forward.3} parent=5 // pred_check
        _
      $region45: #{simple_lstm_forward.3} parent=5 // pred_check_branch
        %214 = sbr.rel (%p211) target = $region47
      $region46: #{simple_lstm_forward.3} parent=5 // pred_region
        %s215 = ssub.s32 %s8, 1
        %s216 = sand.u32 %s35, 1
        %s217 = sand.u32 %s35, 1
        %s218 = smul.addr %s217, 256
        %s219 = scalar_lea.vmem [#allocation4], %s218
        // Predicated region
        $region48: #{simple_lstm_forward.3} parent=46 // pred_check
          %p220 = pneg %p48
        $region49: #{simple_lstm_forward.3} parent=46 // pred_check_branch
          %222 = sbr.rel (%p220) target = $region51
        $region50: #{simple_lstm_forward.3} parent=46 // pred_region
          _
        $region51: #{simple_lstm_forward.3} parent=46 // pred_fallthru
          _
        %s223 = sand.u32 %s35, 1
        %s224 = sand.u32 %s35, 1
        %s225 = smul.addr %s224, 256
        %s226 = scalar_lea.vmem [#allocation4], %s225
        %p227 = pneg %p48
        %p228 = pneg %p45
        %p229 = pneg %p69
        %p230 = pneg %p66
        %p231 = pneg %p95
        %p232 = pneg %p92
        %p233 = scmp.lt.s32.totalorder %s17, 1
        %s234 = scalar_select %p233, %s17, 1
        %s235 = smul.addr %s234, 8
        %s236 = scalar_lea.vmem %s2, %s235
        %s237 = smul.u32 8, %s18
        %p238 = scmp.lt.s32.totalorder %s17, 1
        %s239 = scalar_select %p238, %s17, 1
        %s240 = smul.addr %s239, 8
        %s241 = scalar_lea.vmem %s2, %s240
        %p242 = scmp.eq.s32.totalorder %s18, 0
        // Predicated region
        $region52: #{simple_lstm_forward.3} parent=46 // pred_check
          %p243 = pneg %p242
        $region53: #{simple_lstm_forward.3} parent=46 // pred_check_branch
          %245 = sbr.rel (%p243) target = $region55
        $region54: #{simple_lstm_forward.3} parent=46 // pred_region
          %246 = vst [vmem:[#allocation2] sm:$0xff] 0.0
          %247 = vst [vmem:[#allocation3] sm:$0xff] 0.0
        $region55: #{simple_lstm_forward.3} parent=46 // pred_fallthru
          _
        %v248 = vld [vmem:[%s1] sm:$0xff]
        %v249 = vld [vmem:[%s1 + $0x8] sm:$0xff]
        %v250 = vld [vmem:[%s1 + $0x10] sm:$0xff]
        %v251 = vld [vmem:[%s1 + $0x18] sm:$0xff]
        %v252 = vld [vmem:[%s1 + $0x20] sm:$0xff]
        %v253 = vld [vmem:[%s1 + $0x28] sm:$0xff]
        %v254 = vld [vmem:[%s1 + $0x30] sm:$0xff]
        %v255 = vld [vmem:[%s1 + $0x38] sm:$0xff]
        %v256 = vld [vmem:[%s1 + $0x40] sm:$0xff]
        %v257 = vld [vmem:[%s1 + $0x48] sm:$0xff]
        %v258 = vld [vmem:[%s1 + $0x50] sm:$0xff]
        %v259 = vld [vmem:[%s1 + $0x58] sm:$0xff]
        %v260 = vld [vmem:[%s1 + $0x60] sm:$0xff]
        %v261 = vld [vmem:[%s1 + $0x68] sm:$0xff]
        %v262 = vld [vmem:[%s1 + $0x70] sm:$0xff]
        %v263 = vld [vmem:[%s1 + $0x78] sm:$0xff]
        %v264 = vld [vmem:[%s1 + $0x80] sm:$0xff]
        %v265 = vld [vmem:[%s1 + $0x88] sm:$0xff]
        %v266 = vld [vmem:[%s1 + $0x90] sm:$0xff]
        %v267 = vld [vmem:[%s1 + $0x98] sm:$0xff]
        %v268 = vld [vmem:[%s1 + $0xa0] sm:$0xff]
        %v269 = vld [vmem:[%s1 + $0xa8] sm:$0xff]
        %v270 = vld [vmem:[%s1 + $0xb0] sm:$0xff]
        %v271 = vld [vmem:[%s1 + $0xb8] sm:$0xff]
        %v272 = vld [vmem:[%s1 + $0xc0] sm:$0xff]
        %v273 = vld [vmem:[%s1 + $0xc8] sm:$0xff]
        %v274 = vld [vmem:[%s1 + $0xd0] sm:$0xff]
        %v275 = vld [vmem:[%s1 + $0xd8] sm:$0xff]
        %v276 = vld [vmem:[%s1 + $0xe0] sm:$0xff]
        %v277 = vld [vmem:[%s1 + $0xe8] sm:$0xff]
        %v278 = vld [vmem:[%s1 + $0xf0] sm:$0xff]
        %v279 = vld [vmem:[%s1 + $0xf8] sm:$0xff]
        %v280 = vld [vmem:[%s1 + $0x100] sm:$0xff]
        %v281 = vld [vmem:[%s1 + $0x108] sm:$0xff]
        %v282 = vld [vmem:[%s1 + $0x110] sm:$0xff]
        %v283 = vld [vmem:[%s1 + $0x118] sm:$0xff]
        %v284 = vld [vmem:[%s1 + $0x120] sm:$0xff]
        %v285 = vld [vmem:[%s1 + $0x128] sm:$0xff]
        %v286 = vld [vmem:[%s1 + $0x130] sm:$0xff]
        %v287 = vld [vmem:[%s1 + $0x138] sm:$0xff]
        %v288 = vld [vmem:[%s1 + $0x140] sm:$0xff]
        %v289 = vld [vmem:[%s1 + $0x148] sm:$0xff]
        %v290 = vld [vmem:[%s1 + $0x150] sm:$0xff]
        %v291 = vld [vmem:[%s1 + $0x158] sm:$0xff]
        %v292 = vld [vmem:[%s1 + $0x160] sm:$0xff]
        %v293 = vld [vmem:[%s1 + $0x168] sm:$0xff]
        %v294 = vld [vmem:[%s1 + $0x170] sm:$0xff]
        %v295 = vld [vmem:[%s1 + $0x178] sm:$0xff]
        %v296 = vld [vmem:[%s1 + $0x180] sm:$0xff]
        %v297 = vld [vmem:[%s1 + $0x188] sm:$0xff]
        %v298 = vld [vmem:[%s1 + $0x190] sm:$0xff]
        %v299 = vld [vmem:[%s1 + $0x198] sm:$0xff]
        %v300 = vld [vmem:[%s1 + $0x1a0] sm:$0xff]
        %v301 = vld [vmem:[%s1 + $0x1a8] sm:$0xff]
        %v302 = vld [vmem:[%s1 + $0x1b0] sm:$0xff]
        %v303 = vld [vmem:[%s1 + $0x1b8] sm:$0xff]
        %v304 = vld [vmem:[%s1 + $0x1c0] sm:$0xff]
        %v305 = vld [vmem:[%s1 + $0x1c8] sm:$0xff]
        %v306 = vld [vmem:[%s1 + $0x1d0] sm:$0xff]
        %v307 = vld [vmem:[%s1 + $0x1d8] sm:$0xff]
        %v308 = vld [vmem:[%s1 + $0x1e0] sm:$0xff]
        %v309 = vld [vmem:[%s1 + $0x1e8] sm:$0xff]
        %v310 = vld [vmem:[%s1 + $0x1f0] sm:$0xff]
        %v311 = vld [vmem:[%s1 + $0x1f8] sm:$0xff]
        %v312 = vld [vmem:[#allocation2] sm:$0xff]
        %v313 = vld [vmem:[#allocation3] sm:$0xff]
        %v314 = vld [vmem:[%s219] sm:$0xff]
        %v315 = vld [vmem:[%s219 + $0x8] sm:$0xff]
        %v316 = vld [vmem:[%s219 + $0x10] sm:$0xff]
        %v317 = vld [vmem:[%s219 + $0x18] sm:$0xff]
        %318 = vmatprep.subr.mxu0 %v249
        %319 = vmatpush1.msra.mxu0 %v248
        %320 = vmatprep.subr.mxu0 %v253
        %321 = vmatpush1.msra.mxu0 %v252
        %322 = vmatprep.subr.mxu0 %v257
        %323 = vmatpush1.msra.mxu0 %v256
        %324 = vmatprep.subr.mxu0 %v261
        %325 = vmatpush1.msra.mxu0 %v260
        %326 = vmatprep.subr.mxu0 %v265
        %327 = vmatpush1.msra.mxu0 %v264
        %328 = vmatprep.subr.mxu0 %v269
        %329 = vmatpush1.msra.mxu0 %v268
        %330 = vmatprep.subr.mxu0 %v273
        %331 = vmatpush1.msra.mxu0 %v272
        %332 = vmatprep.subr.mxu0 %v277
        %333 = vmatpush1.msra.mxu0 %v276
        %334 = vmatprep.subr.mxu0 %v281
        %335 = vmatpush1.msra.mxu0 %v280
        %336 = vmatprep.subr.mxu0 %v285
        %337 = vmatpush1.msra.mxu0 %v284
        %338 = vmatprep.subr.mxu0 %v289
        %339 = vmatpush1.msra.mxu0 %v288
        %340 = vmatprep.subr.mxu0 %v293
        %341 = vmatpush1.msra.mxu0 %v292
        %342 = vmatprep.subr.mxu0 %v297
        %343 = vmatpush1.msra.mxu0 %v296
        %344 = vmatprep.subr.mxu0 %v301
        %345 = vmatpush1.msra.mxu0 %v300
        %346 = vmatprep.subr.mxu0 %v305
        %347 = vmatpush1.msra.mxu0 %v304
        %348 = vmatprep.subr.mxu0 %v309
        %349 = vmatpush1.msra.mxu0 %v308
        %350 = vmatprep.subr.mxu0 0.0
        %351 = vmatpush1.msra.mxu0 0.0
        %352 = vmatprep.subr.mxu0 0.0
        %353 = vmatpush1.msra.mxu0 0.0
        %354 = vmatprep.subr.mxu0 0.0
        %355 = vmatpush1.msra.mxu0 0.0
        %356 = vmatprep.subr.mxu0 0.0
        %357 = vmatpush1.msra.mxu0 0.0
        %358 = vmatprep.subr.mxu0 0.0
        %359 = vmatpush1.msra.mxu0 0.0
        %360 = vmatprep.subr.mxu0 0.0
        %361 = vmatpush1.msra.mxu0 0.0
        %362 = vmatprep.subr.mxu0 0.0
        %363 = vmatpush1.msra.mxu0 0.0
        %364 = vmatprep.subr.mxu0 0.0
        %365 = vmatpush1.msra.mxu0 0.0
        %366 = vmatprep.subr.mxu0 0.0
        %367 = vmatpush1.msra.mxu0 0.0
        %368 = vmatprep.subr.mxu0 0.0
        %369 = vmatpush1.msra.mxu0 0.0
        %370 = vmatprep.subr.mxu0 0.0
        %371 = vmatpush1.msra.mxu0 0.0
        %372 = vmatprep.subr.mxu0 0.0
        %373 = vmatpush1.msra.mxu0 0.0
        %374 = vmatprep.subr.mxu0 0.0
        %375 = vmatpush1.msra.mxu0 0.0
        %376 = vmatprep.subr.mxu0 0.0
        %377 = vmatpush1.msra.mxu0 0.0
        %378 = vmatprep.subr.mxu0 0.0
        %379 = vmatpush1.msra.mxu0 0.0
        %380 = vmatprep.subr.mxu0 0.0
        %381 = vmatpush1.msra.mxu0 0.0
        %382 = vmatprep.mubr.f32.mxu0 0.0
        %383 = vmatmul.mubr.f32.gmra.mrb[0].mxu0 %v312
        %v384 = vpop.f32.mrb[0].mxu0
        %v385 = vadd.f32 0.0, %v384
        %v386 = vpop.f32.mrb[0].mxu0
        %v387 = vadd.f32 0.0, %v386
        %388 = vdwg.mxu0
        %389 = vmatprep.subr.mxu0 %v251
        %390 = vmatpush1.msra.mxu0 %v250
        %391 = vmatprep.subr.mxu0 %v255
        %392 = vmatpush1.msra.mxu0 %v254
        %393 = vmatprep.subr.mxu0 %v259
        %394 = vmatpush1.msra.mxu0 %v258
        %395 = vmatprep.subr.mxu0 %v263
        %396 = vmatpush1.msra.mxu0 %v262
        %397 = vmatprep.subr.mxu0 %v267
        %398 = vmatpush1.msra.mxu0 %v266
        %399 = vmatprep.subr.mxu0 %v271
        %400 = vmatpush1.msra.mxu0 %v270
        %401 = vmatprep.subr.mxu0 %v275
        %402 = vmatpush1.msra.mxu0 %v274
        %403 = vmatprep.subr.mxu0 %v279
        %404 = vmatpush1.msra.mxu0 %v278
        %405 = vmatprep.subr.mxu0 %v283
        %406 = vmatpush1.msra.mxu0 %v282
        %407 = vmatprep.subr.mxu0 %v287
        %408 = vmatpush1.msra.mxu0 %v286
        %409 = vmatprep.subr.mxu0 %v291
        %410 = vmatpush1.msra.mxu0 %v290
        %411 = vmatprep.subr.mxu0 %v295
        %412 = vmatpush1.msra.mxu0 %v294
        %413 = vmatprep.subr.mxu0 %v299
        %414 = vmatpush1.msra.mxu0 %v298
        %415 = vmatprep.subr.mxu0 %v303
        %416 = vmatpush1.msra.mxu0 %v302
        %417 = vmatprep.subr.mxu0 %v307
        %418 = vmatpush1.msra.mxu0 %v306
        %419 = vmatprep.subr.mxu0 %v311
        %420 = vmatpush1.msra.mxu0 %v310
        %421 = vmatprep.subr.mxu0 0.0
        %422 = vmatpush1.msra.mxu0 0.0
        %423 = vmatprep.subr.mxu0 0.0
        %424 = vmatpush1.msra.mxu0 0.0
        %425 = vmatprep.subr.mxu0 0.0
        %426 = vmatpush1.msra.mxu0 0.0
        %427 = vmatprep.subr.mxu0 0.0
        %428 = vmatpush1.msra.mxu0 0.0
        %429 = vmatprep.subr.mxu0 0.0
        %430 = vmatpush1.msra.mxu0 0.0
        %431 = vmatprep.subr.mxu0 0.0
        %432 = vmatpush1.msra.mxu0 0.0
        %433 = vmatprep.subr.mxu0 0.0
        %434 = vmatpush1.msra.mxu0 0.0
        %435 = vmatprep.subr.mxu0 0.0
        %436 = vmatpush1.msra.mxu0 0.0
        %437 = vmatprep.subr.mxu0 0.0
        %438 = vmatpush1.msra.mxu0 0.0
        %439 = vmatprep.subr.mxu0 0.0
        %440 = vmatpush1.msra.mxu0 0.0
        %441 = vmatprep.subr.mxu0 0.0
        %442 = vmatpush1.msra.mxu0 0.0
        %443 = vmatprep.subr.mxu0 0.0
        %444 = vmatpush1.msra.mxu0 0.0
        %445 = vmatprep.subr.mxu0 0.0
        %446 = vmatpush1.msra.mxu0 0.0
        %447 = vmatprep.subr.mxu0 0.0
        %448 = vmatpush1.msra.mxu0 0.0
        %449 = vmatprep.subr.mxu0 0.0
        %450 = vmatpush1.msra.mxu0 0.0
        %451 = vmatprep.subr.mxu0 0.0
        %452 = vmatpush1.msra.mxu0 0.0
        %453 = vmatprep.mubr.f32.mxu0 0.0
        %454 = vmatmul.mubr.f32.gmra.mrb[0].mxu0 %v312
        %v455 = vpop.f32.mrb[0].mxu0
        %v456 = vadd.f32 0.0, %v455
        %v457 = vpop.f32.mrb[0].mxu0
        %v458 = vadd.f32 0.0, %v457
        %459 = vdwg.mxu0
        %v460 = vadd.f32 %v314, %v385
        %v461 = vadd.f32 %v315, %v387
        %v462 = vadd.f32 %v316, %v456
        %v463 = vadd.f32 %v317, %v458
        %v464 = vmul.f32 %v460, 0.5
        %v465 = vtanh.pop %v464
        %v466 = vadd.f32 %v465, 1.0
        %v467 = vmul.f32 %v466, 0.5
        %v468 = vmul.f32 %v461, 0.5
        %v469 = vtanh.pop %v468
        %v470 = vadd.f32 %v469, 1.0
        %v471 = vmul.f32 %v470, 0.5
        %v472 = vtanh.pop %v462
        %v473 = vmul.f32 %v463, 0.5
        %v474 = vtanh.pop %v473
        %v475 = vadd.f32 %v474, 1.0
        %v476 = vmul.f32 %v475, 0.5
        %v477 = vmul.f32 %v471, %v313
        %v478 = vmul.f32 %v467, %v472
        %v479 = vadd.f32 %v477, %v478
        %v480 = vtanh.pop %v479
        %v481 = vmul.f32 %v476, %v480
        %s482 = scalar_lea.vmem %s219, 32 [#allocation4]
        %v483 = vld [vmem:[%s482] sm:$0xff]
        %v484 = vld [vmem:[%s482 + $0x8] sm:$0xff]
        %v485 = vld [vmem:[%s482 + $0x10] sm:$0xff]
        %v486 = vld [vmem:[%s482 + $0x18] sm:$0xff]
        %487 = vmatprep.subr.mxu0 %v249
        %488 = vmatpush1.msra.mxu0 %v248
        %489 = vmatprep.subr.mxu0 %v253
        %490 = vmatpush1.msra.mxu0 %v252
        %491 = vmatprep.subr.mxu0 %v257
        %492 = vmatpush1.msra.mxu0 %v256
        %493 = vmatprep.subr.mxu0 %v261
        %494 = vmatpush1.msra.mxu0 %v260
        %495 = vmatprep.subr.mxu0 %v265
        %496 = vmatpush1.msra.mxu0 %v264
        %497 = vmatprep.subr.mxu0 %v269
        %498 = vmatpush1.msra.mxu0 %v268
        %499 = vmatprep.subr.mxu0 %v273
        %500 = vmatpush1.msra.mxu0 %v272
        %501 = vmatprep.subr.mxu0 %v277
        %502 = vmatpush1.msra.mxu0 %v276
        %503 = vmatprep.subr.mxu0 %v281
        %504 = vmatpush1.msra.mxu0 %v280
        %505 = vmatprep.subr.mxu0 %v285
        %506 = vmatpush1.msra.mxu0 %v284
        %507 = vmatprep.subr.mxu0 %v289
        %508 = vmatpush1.msra.mxu0 %v288
        %509 = vmatprep.subr.mxu0 %v293
        %510 = vmatpush1.msra.mxu0 %v292
        %511 = vmatprep.subr.mxu0 %v297
        %512 = vmatpush1.msra.mxu0 %v296
        %513 = vmatprep.subr.mxu0 %v301
        %514 = vmatpush1.msra.mxu0 %v300
        %515 = vmatprep.subr.mxu0 %v305
        %516 = vmatpush1.msra.mxu0 %v304
        %517 = vmatprep.subr.mxu0 %v309
        %518 = vmatpush1.msra.mxu0 %v308
        %519 = vmatprep.subr.mxu0 0.0
        %520 = vmatpush1.msra.mxu0 0.0
        %521 = vmatprep.subr.mxu0 0.0
        %522 = vmatpush1.msra.mxu0 0.0
        %523 = vmatprep.subr.mxu0 0.0
        %524 = vmatpush1.msra.mxu0 0.0
        %525 = vmatprep.subr.mxu0 0.0
        %526 = vmatpush1.msra.mxu0 0.0
        %527 = vmatprep.subr.mxu0 0.0
        %528 = vmatpush1.msra.mxu0 0.0
        %529 = vmatprep.subr.mxu0 0.0
        %530 = vmatpush1.msra.mxu0 0.0
        %531 = vmatprep.subr.mxu0 0.0
        %532 = vmatpush1.msra.mxu0 0.0
        %533 = vmatprep.subr.mxu0 0.0
        %534 = vmatpush1.msra.mxu0 0.0
        %535 = vmatprep.subr.mxu0 0.0
        %536 = vmatpush1.msra.mxu0 0.0
        %537 = vmatprep.subr.mxu0 0.0
        %538 = vmatpush1.msra.mxu0 0.0
        %539 = vmatprep.subr.mxu0 0.0
        %540 = vmatpush1.msra.mxu0 0.0
        %541 = vmatprep.subr.mxu0 0.0
        %542 = vmatpush1.msra.mxu0 0.0
        %543 = vmatprep.subr.mxu0 0.0
        %544 = vmatpush1.msra.mxu0 0.0
        %545 = vmatprep.subr.mxu0 0.0
        %546 = vmatpush1.msra.mxu0 0.0
        %547 = vmatprep.subr.mxu0 0.0
        %548 = vmatpush1.msra.mxu0 0.0
        %549 = vmatprep.subr.mxu0 0.0
        %550 = vmatpush1.msra.mxu0 0.0
        %551 = vmatprep.mubr.f32.mxu0 0.0
        %552 = vmatmul.mubr.f32.gmra.mrb[0].mxu0 %v481
        %v553 = vpop.f32.mrb[0].mxu0
        %v554 = vadd.f32 0.0, %v553
        %v555 = vpop.f32.mrb[0].mxu0
        %v556 = vadd.f32 0.0, %v555
        %557 = vdwg.mxu0
        %558 = vmatprep.subr.mxu0 %v251
        %559 = vmatpush1.msra.mxu0 %v250
        %560 = vmatprep.subr.mxu0 %v255
        %561 = vmatpush1.msra.mxu0 %v254
        %562 = vmatprep.subr.mxu0 %v259
        %563 = vmatpush1.msra.mxu0 %v258
        %564 = vmatprep.subr.mxu0 %v263
        %565 = vmatpush1.msra.mxu0 %v262
        %566 = vmatprep.subr.mxu0 %v267
        %567 = vmatpush1.msra.mxu0 %v266
        %568 = vmatprep.subr.mxu0 %v271
        %569 = vmatpush1.msra.mxu0 %v270
        %570 = vmatprep.subr.mxu0 %v275
        %571 = vmatpush1.msra.mxu0 %v274
        %572 = vmatprep.subr.mxu0 %v279
        %573 = vmatpush1.msra.mxu0 %v278
        %574 = vmatprep.subr.mxu0 %v283
        %575 = vmatpush1.msra.mxu0 %v282
        %576 = vmatprep.subr.mxu0 %v287
        %577 = vmatpush1.msra.mxu0 %v286
        %578 = vmatprep.subr.mxu0 %v291
        %579 = vmatpush1.msra.mxu0 %v290
        %580 = vmatprep.subr.mxu0 %v295
        %581 = vmatpush1.msra.mxu0 %v294
        %582 = vmatprep.subr.mxu0 %v299
        %583 = vmatpush1.msra.mxu0 %v298
        %584 = vmatprep.subr.mxu0 %v303
        %585 = vmatpush1.msra.mxu0 %v302
        %586 = vmatprep.subr.mxu0 %v307
        %587 = vmatpush1.msra.mxu0 %v306
        %588 = vmatprep.subr.mxu0 %v311
        %589 = vmatpush1.msra.mxu0 %v310
        %590 = vmatprep.subr.mxu0 0.0
        %591 = vmatpush1.msra.mxu0 0.0
        %592 = vmatprep.subr.mxu0 0.0
        %593 = vmatpush1.msra.mxu0 0.0
        %594 = vmatprep.subr.mxu0 0.0
        %595 = vmatpush1.msra.mxu0 0.0
        %596 = vmatprep.subr.mxu0 0.0
        %597 = vmatpush1.msra.mxu0 0.0
        %598 = vmatprep.subr.mxu0 0.0
        %599 = vmatpush1.msra.mxu0 0.0
        %600 = vmatprep.subr.mxu0 0.0
        %601 = vmatpush1.msra.mxu0 0.0
        %602 = vmatprep.subr.mxu0 0.0
        %603 = vmatpush1.msra.mxu0 0.0
        %604 = vmatprep.subr.mxu0 0.0
        %605 = vmatpush1.msra.mxu0 0.0
        %606 = vmatprep.subr.mxu0 0.0
        %607 = vmatpush1.msra.mxu0 0.0
        %608 = vmatprep.subr.mxu0 0.0
        %609 = vmatpush1.msra.mxu0 0.0
        %610 = vmatprep.subr.mxu0 0.0
        %611 = vmatpush1.msra.mxu0 0.0
        %612 = vmatprep.subr.mxu0 0.0
        %613 = vmatpush1.msra.mxu0 0.0
        %614 = vmatprep.subr.mxu0 0.0
        %615 = vmatpush1.msra.mxu0 0.0
        %616 = vmatprep.subr.mxu0 0.0
        %617 = vmatpush1.msra.mxu0 0.0
        %618 = vmatprep.subr.mxu0 0.0
        %619 = vmatpush1.msra.mxu0 0.0
        %620 = vmatprep.subr.mxu0 0.0
        %621 = vmatpush1.msra.mxu0 0.0
        %622 = vmatprep.mubr.f32.mxu0 0.0
        %623 = vmatmul.mubr.f32.gmra.mrb[0].mxu0 %v481
        %v624 = vpop.f32.mrb[0].mxu0
        %v625 = vadd.f32 0.0, %v624
        %v626 = vpop.f32.mrb[0].mxu0
        %v627 = vadd.f32 0.0, %v626
        %628 = vdwg.mxu0
        %v629 = vadd.f32 %v483, %v554
        %v630 = vadd.f32 %v484, %v556
        %v631 = vadd.f32 %v485, %v625
        %v632 = vadd.f32 %v486, %v627
        %v633 = vmul.f32 %v629, 0.5
        %v634 = vtanh.pop %v633
        %v635 = vadd.f32 %v634, 1.0
        %v636 = vmul.f32 %v635, 0.5
        %v637 = vmul.f32 %v630, 0.5
        %v638 = vtanh.pop %v637
        %v639 = vadd.f32 %v638, 1.0
        %v640 = vmul.f32 %v639, 0.5
        %v641 = vtanh.pop %v631
        %v642 = vmul.f32 %v632, 0.5
        %v643 = vtanh.pop %v642
        %v644 = vadd.f32 %v643, 1.0
        %v645 = vmul.f32 %v644, 0.5
        %v646 = vmul.f32 %v640, %v479
        %v647 = vmul.f32 %v636, %v641
        %v648 = vadd.f32 %v646, %v647
        %v649 = vtanh.pop %v648
        %v650 = vmul.f32 %v645, %v649
        %s651 = scalar_lea.vmem %s219, 64 [#allocation4]
        %v652 = vld [vmem:[%s651] sm:$0xff]
        %v653 = vld [vmem:[%s651 + $0x8] sm:$0xff]
        %v654 = vld [vmem:[%s651 + $0x10] sm:$0xff]
        %v655 = vld [vmem:[%s651 + $0x18] sm:$0xff]
        %656 = vmatprep.subr.mxu0 %v249
        %657 = vmatpush1.msra.mxu0 %v248
        %658 = vmatprep.subr.mxu0 %v253
        %659 = vmatpush1.msra.mxu0 %v252
        %660 = vmatprep.subr.mxu0 %v257
        %661 = vmatpush1.msra.mxu0 %v256
        %662 = vmatprep.subr.mxu0 %v261
        %663 = vmatpush1.msra.mxu0 %v260
        %664 = vmatprep.subr.mxu0 %v265
        %665 = vmatpush1.msra.mxu0 %v264
        %666 = vmatprep.subr.mxu0 %v269
        %667 = vmatpush1.msra.mxu0 %v268
        %668 = vmatprep.subr.mxu0 %v273
        %669 = vmatpush1.msra.mxu0 %v272
        %670 = vmatprep.subr.mxu0 %v277
        %671 = vmatpush1.msra.mxu0 %v276
        %672 = vmatprep.subr.mxu0 %v281
        %673 = vmatpush1.msra.mxu0 %v280
        %674 = vmatprep.subr.mxu0 %v285
        %675 = vmatpush1.msra.mxu0 %v284
        %676 = vmatprep.subr.mxu0 %v289
        %677 = vmatpush1.msra.mxu0 %v288
        %678 = vmatprep.subr.mxu0 %v293
        %679 = vmatpush1.msra.mxu0 %v292
        %680 = vmatprep.subr.mxu0 %v297
        %681 = vmatpush1.msra.mxu0 %v296
        %682 = vmatprep.subr.mxu0 %v301
        %683 = vmatpush1.msra.mxu0 %v300
        %684 = vmatprep.subr.mxu0 %v305
        %685 = vmatpush1.msra.mxu0 %v304
        %686 = vmatprep.subr.mxu0 %v309
        %687 = vmatpush1.msra.mxu0 %v308
        %688 = vmatprep.subr.mxu0 0.0
        %689 = vmatpush1.msra.mxu0 0.0
        %690 = vmatprep.subr.mxu0 0.0
        %691 = vmatpush1.msra.mxu0 0.0
        %692 = vmatprep.subr.mxu0 0.0
        %693 = vmatpush1.msra.mxu0 0.0
        %694 = vmatprep.subr.mxu0 0.0
        %695 = vmatpush1.msra.mxu0 0.0
        %696 = vmatprep.subr.mxu0 0.0
        %697 = vmatpush1.msra.mxu0 0.0
        %698 = vmatprep.subr.mxu0 0.0
        %699 = vmatpush1.msra.mxu0 0.0
        %700 = vmatprep.subr.mxu0 0.0
        %701 = vmatpush1.msra.mxu0 0.0
        %702 = vmatprep.subr.mxu0 0.0
        %703 = vmatpush1.msra.mxu0 0.0
        %704 = vmatprep.subr.mxu0 0.0
        %705 = vmatpush1.msra.mxu0 0.0
        %706 = vmatprep.subr.mxu0 0.0
        %707 = vmatpush1.msra.mxu0 0.0
        %708 = vmatprep.subr.mxu0 0.0
        %709 = vmatpush1.msra.mxu0 0.0
        %710 = vmatprep.subr.mxu0 0.0
        %711 = vmatpush1.msra.mxu0 0.0
        %712 = vmatprep.subr.mxu0 0.0
        %713 = vmatpush1.msra.mxu0 0.0
        %714 = vmatprep.subr.mxu0 0.0
        %715 = vmatpush1.msra.mxu0 0.0
        %716 = vmatprep.subr.mxu0 0.0
        %717 = vmatpush1.msra.mxu0 0.0
        %718 = vmatprep.subr.mxu0 0.0
        %719 = vmatpush1.msra.mxu0 0.0
        %720 = vmatprep.mubr.f32.mxu0 0.0
        %721 = vmatmul.mubr.f32.gmra.mrb[0].mxu0 %v650
        %v722 = vpop.f32.mrb[0].mxu0
        %v723 = vadd.f32 0.0, %v722
        %v724 = vpop.f32.mrb[0].mxu0
        %v725 = vadd.f32 0.0, %v724
        %726 = vdwg.mxu0
        %727 = vmatprep.subr.mxu0 %v251
        %728 = vmatpush1.msra.mxu0 %v250
        %729 = vmatprep.subr.mxu0 %v255
        %730 = vmatpush1.msra.mxu0 %v254
        %731 = vmatprep.subr.mxu0 %v259
        %732 = vmatpush1.msra.mxu0 %v258
        %733 = vmatprep.subr.mxu0 %v263
        %734 = vmatpush1.msra.mxu0 %v262
        %735 = vmatprep.subr.mxu0 %v267
        %736 = vmatpush1.msra.mxu0 %v266
        %737 = vmatprep.subr.mxu0 %v271
        %738 = vmatpush1.msra.mxu0 %v270
        %739 = vmatprep.subr.mxu0 %v275
        %740 = vmatpush1.msra.mxu0 %v274
        %741 = vmatprep.subr.mxu0 %v279
        %742 = vmatpush1.msra.mxu0 %v278
        %743 = vmatprep.subr.mxu0 %v283
        %744 = vmatpush1.msra.mxu0 %v282
        %745 = vmatprep.subr.mxu0 %v287
        %746 = vmatpush1.msra.mxu0 %v286
        %747 = vmatprep.subr.mxu0 %v291
        %748 = vmatpush1.msra.mxu0 %v290
        %749 = vmatprep.subr.mxu0 %v295
        %750 = vmatpush1.msra.mxu0 %v294
        %751 = vmatprep.subr.mxu0 %v299
        %752 = vmatpush1.msra.mxu0 %v298
        %753 = vmatprep.subr.mxu0 %v303
        %754 = vmatpush1.msra.mxu0 %v302
        %755 = vmatprep.subr.mxu0 %v307
        %756 = vmatpush1.msra.mxu0 %v306
        %757 = vmatprep.subr.mxu0 %v311
        %758 = vmatpush1.msra.mxu0 %v310
        %759 = vmatprep.subr.mxu0 0.0
        %760 = vmatpush1.msra.mxu0 0.0
        %761 = vmatprep.subr.mxu0 0.0
        %762 = vmatpush1.msra.mxu0 0.0
        %763 = vmatprep.subr.mxu0 0.0
        %764 = vmatpush1.msra.mxu0 0.0
        %765 = vmatprep.subr.mxu0 0.0
        %766 = vmatpush1.msra.mxu0 0.0
        %767 = vmatprep.subr.mxu0 0.0
        %768 = vmatpush1.msra.mxu0 0.0
        %769 = vmatprep.subr.mxu0 0.0
        %770 = vmatpush1.msra.mxu0 0.0
        %771 = vmatprep.subr.mxu0 0.0
        %772 = vmatpush1.msra.mxu0 0.0
        %773 = vmatprep.subr.mxu0 0.0
        %774 = vmatpush1.msra.mxu0 0.0
        %775 = vmatprep.subr.mxu0 0.0
        %776 = vmatpush1.msra.mxu0 0.0
        %777 = vmatprep.subr.mxu0 0.0
        %778 = vmatpush1.msra.mxu0 0.0
        %779 = vmatprep.subr.mxu0 0.0
        %780 = vmatpush1.msra.mxu0 0.0
        %781 = vmatprep.subr.mxu0 0.0
        %782 = vmatpush1.msra.mxu0 0.0
        %783 = vmatprep.subr.mxu0 0.0
        %784 = vmatpush1.msra.mxu0 0.0
        %785 = vmatprep.subr.mxu0 0.0
        %786 = vmatpush1.msra.mxu0 0.0
        %787 = vmatprep.subr.mxu0 0.0
        %788 = vmatpush1.msra.mxu0 0.0
        %789 = vmatprep.subr.mxu0 0.0
        %790 = vmatpush1.msra.mxu0 0.0
        %791 = vmatprep.mubr.f32.mxu0 0.0
        %792 = vmatmul.mubr.f32.gmra.mrb[0].mxu0 %v650
        %v793 = vpop.f32.mrb[0].mxu0
        %v794 = vadd.f32 0.0, %v793
        %v795 = vpop.f32.mrb[0].mxu0
        %v796 = vadd.f32 0.0, %v795
        %797 = vdwg.mxu0
        %v798 = vadd.f32 %v652, %v723
        %v799 = vadd.f32 %v653, %v725
        %v800 = vadd.f32 %v654, %v794
        %v801 = vadd.f32 %v655, %v796
        %v802 = vmul.f32 %v798, 0.5
        %v803 = vtanh.pop %v802
        %v804 = vadd.f32 %v803, 1.0
        %v805 = vmul.f32 %v804, 0.5
        %v806 = vmul.f32 %v799, 0.5
        %v807 = vtanh.pop %v806
        %v808 = vadd.f32 %v807, 1.0
        %v809 = vmul.f32 %v808, 0.5
        %v810 = vtanh.pop %v800
        %v811 = vmul.f32 %v801, 0.5
        %v812 = vtanh.pop %v811
        %v813 = vadd.f32 %v812, 1.0
        %v814 = vmul.f32 %v813, 0.5
        %v815 = vmul.f32 %v809, %v648
        %v816 = vmul.f32 %v805, %v810
        %v817 = vadd.f32 %v815, %v816
        %v818 = vtanh.pop %v817
        %v819 = vmul.f32 %v814, %v818
        %s820 = scalar_lea.vmem %s219, 96 [#allocation4]
        %v821 = vld [vmem:[%s820] sm:$0xff]
        %v822 = vld [vmem:[%s820 + $0x8] sm:$0xff]
        %v823 = vld [vmem:[%s820 + $0x10] sm:$0xff]
        %v824 = vld [vmem:[%s820 + $0x18] sm:$0xff]
        %825 = vmatprep.subr.mxu0 %v249
        %826 = vmatpush1.msra.mxu0 %v248
        %827 = vmatprep.subr.mxu0 %v253
        %828 = vmatpush1.msra.mxu0 %v252
        %829 = vmatprep.subr.mxu0 %v257
        %830 = vmatpush1.msra.mxu0 %v256
        %831 = vmatprep.subr.mxu0 %v261
        %832 = vmatpush1.msra.mxu0 %v260
        %833 = vmatprep.subr.mxu0 %v265
        %834 = vmatpush1.msra.mxu0 %v264
        %835 = vmatprep.subr.mxu0 %v269
        %836 = vmatpush1.msra.mxu0 %v268
        %837 = vmatprep.subr.mxu0 %v273
        %838 = vmatpush1.msra.mxu0 %v272
        %839 = vmatprep.subr.mxu0 %v277
        %840 = vmatpush1.msra.mxu0 %v276
        %841 = vmatprep.subr.mxu0 %v281
        %842 = vmatpush1.msra.mxu0 %v280
        %843 = vmatprep.subr.mxu0 %v285
        %844 = vmatpush1.msra.mxu0 %v284
        %845 = vmatprep.subr.mxu0 %v289
        %846 = vmatpush1.msra.mxu0 %v288
        %847 = vmatprep.subr.mxu0 %v293
        %848 = vmatpush1.msra.mxu0 %v292
        %849 = vmatprep.subr.mxu0 %v297
        %850 = vmatpush1.msra.mxu0 %v296
        %851 = vmatprep.subr.mxu0 %v301
        %852 = vmatpush1.msra.mxu0 %v300
        %853 = vmatprep.subr.mxu0 %v305
        %854 = vmatpush1.msra.mxu0 %v304
        %855 = vmatprep.subr.mxu0 %v309
        %856 = vmatpush1.msra.mxu0 %v308
        %857 = vmatprep.subr.mxu0 0.0
        %858 = vmatpush1.msra.mxu0 0.0
        %859 = vmatprep.subr.mxu0 0.0
        %860 = vmatpush1.msra.mxu0 0.0
        %861 = vmatprep.subr.mxu0 0.0
        %862 = vmatpush1.msra.mxu0 0.0
        %863 = vmatprep.subr.mxu0 0.0
        %864 = vmatpush1.msra.mxu0 0.0
        %865 = vmatprep.subr.mxu0 0.0
        %866 = vmatpush1.msra.mxu0 0.0
        %867 = vmatprep.subr.mxu0 0.0
        %868 = vmatpush1.msra.mxu0 0.0
        %869 = vmatprep.subr.mxu0 0.0
        %870 = vmatpush1.msra.mxu0 0.0
        %871 = vmatprep.subr.mxu0 0.0
        %872 = vmatpush1.msra.mxu0 0.0
        %873 = vmatprep.subr.mxu0 0.0
        %874 = vmatpush1.msra.mxu0 0.0
        %875 = vmatprep.subr.mxu0 0.0
        %876 = vmatpush1.msra.mxu0 0.0
        %877 = vmatprep.subr.mxu0 0.0
        %878 = vmatpush1.msra.mxu0 0.0
        %879 = vmatprep.subr.mxu0 0.0
        %880 = vmatpush1.msra.mxu0 0.0
        %881 = vmatprep.subr.mxu0 0.0
        %882 = vmatpush1.msra.mxu0 0.0
        %883 = vmatprep.subr.mxu0 0.0
        %884 = vmatpush1.msra.mxu0 0.0
        %885 = vmatprep.subr.mxu0 0.0
        %886 = vmatpush1.msra.mxu0 0.0
        %887 = vmatprep.subr.mxu0 0.0
        %888 = vmatpush1.msra.mxu0 0.0
        %889 = vmatprep.mubr.f32.mxu0 0.0
        %890 = vmatmul.mubr.f32.gmra.mrb[0].mxu0 %v819
        %v891 = vpop.f32.mrb[0].mxu0
        %v892 = vadd.f32 0.0, %v891
        %v893 = vpop.f32.mrb[0].mxu0
        %v894 = vadd.f32 0.0, %v893
        %895 = vdwg.mxu0
        %896 = vmatprep.subr.mxu0 %v251
        %897 = vmatpush1.msra.mxu0 %v250
        %898 = vmatprep.subr.mxu0 %v255
        %899 = vmatpush1.msra.mxu0 %v254
        %900 = vmatprep.subr.mxu0 %v259
        %901 = vmatpush1.msra.mxu0 %v258
        %902 = vmatprep.subr.mxu0 %v263
        %903 = vmatpush1.msra.mxu0 %v262
        %904 = vmatprep.subr.mxu0 %v267
        %905 = vmatpush1.msra.mxu0 %v266
        %906 = vmatprep.subr.mxu0 %v271
        %907 = vmatpush1.msra.mxu0 %v270
        %908 = vmatprep.subr.mxu0 %v275
        %909 = vmatpush1.msra.mxu0 %v274
        %910 = vmatprep.subr.mxu0 %v279
        %911 = vmatpush1.msra.mxu0 %v278
        %912 = vmatprep.subr.mxu0 %v283
        %913 = vmatpush1.msra.mxu0 %v282
        %914 = vmatprep.subr.mxu0 %v287
        %915 = vmatpush1.msra.mxu0 %v286
        %916 = vmatprep.subr.mxu0 %v291
        %917 = vmatpush1.msra.mxu0 %v290
        %918 = vmatprep.subr.mxu0 %v295
        %919 = vmatpush1.msra.mxu0 %v294
        %920 = vmatprep.subr.mxu0 %v299
        %921 = vmatpush1.msra.mxu0 %v298
        %922 = vmatprep.subr.mxu0 %v303
        %923 = vmatpush1.msra.mxu0 %v302
        %924 = vmatprep.subr.mxu0 %v307
        %925 = vmatpush1.msra.mxu0 %v306
        %926 = vmatprep.subr.mxu0 %v311
        %927 = vmatpush1.msra.mxu0 %v310
        %928 = vmatprep.subr.mxu0 0.0
        %929 = vmatpush1.msra.mxu0 0.0
        %930 = vmatprep.subr.mxu0 0.0
        %931 = vmatpush1.msra.mxu0 0.0
        %932 = vmatprep.subr.mxu0 0.0
        %933 = vmatpush1.msra.mxu0 0.0
        %934 = vmatprep.subr.mxu0 0.0
        %935 = vmatpush1.msra.mxu0 0.0
        %936 = vmatprep.subr.mxu0 0.0
        %937 = vmatpush1.msra.mxu0 0.0
        %938 = vmatprep.subr.mxu0 0.0
        %939 = vmatpush1.msra.mxu0 0.0
        %940 = vmatprep.subr.mxu0 0.0
        %941 = vmatpush1.msra.mxu0 0.0
        %942 = vmatprep.subr.mxu0 0.0
        %943 = vmatpush1.msra.mxu0 0.0
        %944 = vmatprep.subr.mxu0 0.0
        %945 = vmatpush1.msra.mxu0 0.0
        %946 = vmatprep.subr.mxu0 0.0
        %947 = vmatpush1.msra.mxu0 0.0
        %948 = vmatprep.subr.mxu0 0.0
        %949 = vmatpush1.msra.mxu0 0.0
        %950 = vmatprep.subr.mxu0 0.0
        %951 = vmatpush1.msra.mxu0 0.0
        %952 = vmatprep.subr.mxu0 0.0
        %953 = vmatpush1.msra.mxu0 0.0
        %954 = vmatprep.subr.mxu0 0.0
        %955 = vmatpush1.msra.mxu0 0.0
        %956 = vmatprep.subr.mxu0 0.0
        %957 = vmatpush1.msra.mxu0 0.0
        %958 = vmatprep.subr.mxu0 0.0
        %959 = vmatpush1.msra.mxu0 0.0
        %960 = vmatprep.mubr.f32.mxu0 0.0
        %961 = vmatmul.mubr.f32.gmra.mrb[0].mxu0 %v819
        %v962 = vpop.f32.mrb[0].mxu0
        %v963 = vadd.f32 0.0, %v962
        %v964 = vpop.f32.mrb[0].mxu0
        %v965 = vadd.f32 0.0, %v964
        %966 = vdwg.mxu0
        %v967 = vadd.f32 %v821, %v892
        %v968 = vadd.f32 %v822, %v894
        %v969 = vadd.f32 %v823, %v963
        %v970 = vadd.f32 %v824, %v965
        %v971 = vmul.f32 %v967, 0.5
        %v972 = vtanh.pop %v971
        %v973 = vadd.f32 %v972, 1.0
        %v974 = vmul.f32 %v973, 0.5
        %v975 = vmul.f32 %v968, 0.5
        %v976 = vtanh.pop %v975
        %v977 = vadd.f32 %v976, 1.0
        %v978 = vmul.f32 %v977, 0.5
        %v979 = vtanh.pop %v969
        %v980 = vmul.f32 %v970, 0.5
        %v981 = vtanh.pop %v980
        %v982 = vadd.f32 %v981, 1.0
        %v983 = vmul.f32 %v982, 0.5
        %v984 = vmul.f32 %v978, %v817
        %v985 = vmul.f32 %v974, %v979
        %v986 = vadd.f32 %v984, %v985
        %v987 = vtanh.pop %v986
        %v988 = vmul.f32 %v983, %v987
        %s989 = scalar_lea.vmem %s219, 128 [#allocation4]
        %v990 = vld [vmem:[%s989] sm:$0xff]
        %v991 = vld [vmem:[%s989 + $0x8] sm:$0xff]
        %v992 = vld [vmem:[%s989 + $0x10] sm:$0xff]
        %v993 = vld [vmem:[%s989 + $0x18] sm:$0xff]
        %994 = vmatprep.subr.mxu0 %v249
        %995 = vmatpush1.msra.mxu0 %v248
        %996 = vmatprep.subr.mxu0 %v253
        %997 = vmatpush1.msra.mxu0 %v252
        %998 = vmatprep.subr.mxu0 %v257
        %999 = vmatpush1.msra.mxu0 %v256
        %1000 = vmatprep.subr.mxu0 %v261
        %1001 = vmatpush1.msra.mxu0 %v260
        %1002 = vmatprep.subr.mxu0 %v265
        %1003 = vmatpush1.msra.mxu0 %v264
        %1004 = vmatprep.subr.mxu0 %v269
        %1005 = vmatpush1.msra.mxu0 %v268
        %1006 = vmatprep.subr.mxu0 %v273
        %1007 = vmatpush1.msra.mxu0 %v272
        %1008 = vmatprep.subr.mxu0 %v277
        %1009 = vmatpush1.msra.mxu0 %v276
        %1010 = vmatprep.subr.mxu0 %v281
        %1011 = vmatpush1.msra.mxu0 %v280
        %1012 = vmatprep.subr.mxu0 %v285
        %1013 = vmatpush1.msra.mxu0 %v284
        %1014 = vmatprep.subr.mxu0 %v289
        %1015 = vmatpush1.msra.mxu0 %v288
        %1016 = vmatprep.subr.mxu0 %v293
        %1017 = vmatpush1.msra.mxu0 %v292
        %1018 = vmatprep.subr.mxu0 %v297
        %1019 = vmatpush1.msra.mxu0 %v296
        %1020 = vmatprep.subr.mxu0 %v301
        %1021 = vmatpush1.msra.mxu0 %v300
        %1022 = vmatprep.subr.mxu0 %v305
        %1023 = vmatpush1.msra.mxu0 %v304
        %1024 = vmatprep.subr.mxu0 %v309
        %1025 = vmatpush1.msra.mxu0 %v308
        %1026 = vmatprep.subr.mxu0 0.0
        %1027 = vmatpush1.msra.mxu0 0.0
        %1028 = vmatprep.subr.mxu0 0.0
        %1029 = vmatpush1.msra.mxu0 0.0
        %1030 = vmatprep.subr.mxu0 0.0
        %1031 = vmatpush1.msra.mxu0 0.0
        %1032 = vmatprep.subr.mxu0 0.0
        %1033 = vmatpush1.msra.mxu0 0.0
        %1034 = vmatprep.subr.mxu0 0.0
        %1035 = vmatpush1.msra.mxu0 0.0
        %1036 = vmatprep.subr.mxu0 0.0
        %1037 = vmatpush1.msra.mxu0 0.0
        %1038 = vmatprep.subr.mxu0 0.0
        %1039 = vmatpush1.msra.mxu0 0.0
        %1040 = vmatprep.subr.mxu0 0.0
        %1041 = vmatpush1.msra.mxu0 0.0
        %1042 = vmatprep.subr.mxu0 0.0
        %1043 = vmatpush1.msra.mxu0 0.0
        %1044 = vmatprep.subr.mxu0 0.0
        %1045 = vmatpush1.msra.mxu0 0.0
        %1046 = vmatprep.subr.mxu0 0.0
        %1047 = vmatpush1.msra.mxu0 0.0
        %1048 = vmatprep.subr.mxu0 0.0
        %1049 = vmatpush1.msra.mxu0 0.0
        %1050 = vmatprep.subr.mxu0 0.0
        %1051 = vmatpush1.msra.mxu0 0.0
        %1052 = vmatprep.subr.mxu0 0.0
        %1053 = vmatpush1.msra.mxu0 0.0
        %1054 = vmatprep.subr.mxu0 0.0
        %1055 = vmatpush1.msra.mxu0 0.0
        %1056 = vmatprep.subr.mxu0 0.0
        %1057 = vmatpush1.msra.mxu0 0.0
        %1058 = vmatprep.mubr.f32.mxu0 0.0
        %1059 = vmatmul.mubr.f32.gmra.mrb[0].mxu0 %v988
        %v1060 = vpop.f32.mrb[0].mxu0
        %v1061 = vadd.f32 0.0, %v1060
        %v1062 = vpop.f32.mrb[0].mxu0
        %v1063 = vadd.f32 0.0, %v1062
        %1064 = vdwg.mxu0
        %1065 = vmatprep.subr.mxu0 %v251
        %1066 = vmatpush1.msra.mxu0 %v250
        %1067 = vmatprep.subr.mxu0 %v255
        %1068 = vmatpush1.msra.mxu0 %v254
        %1069 = vmatprep.subr.mxu0 %v259
        %1070 = vmatpush1.msra.mxu0 %v258
        %1071 = vmatprep.subr.mxu0 %v263
        %1072 = vmatpush1.msra.mxu0 %v262
        %1073 = vmatprep.subr.mxu0 %v267
        %1074 = vmatpush1.msra.mxu0 %v266
        %1075 = vmatprep.subr.mxu0 %v271
        %1076 = vmatpush1.msra.mxu0 %v270
        %1077 = vmatprep.subr.mxu0 %v275
        %1078 = vmatpush1.msra.mxu0 %v274
        %1079 = vmatprep.subr.mxu0 %v279
        %1080 = vmatpush1.msra.mxu0 %v278
        %1081 = vmatprep.subr.mxu0 %v283
        %1082 = vmatpush1.msra.mxu0 %v282
        %1083 = vmatprep.subr.mxu0 %v287
        %1084 = vmatpush1.msra.mxu0 %v286
        %1085 = vmatprep.subr.mxu0 %v291
        %1086 = vmatpush1.msra.mxu0 %v290
        %1087 = vmatprep.subr.mxu0 %v295
        %1088 = vmatpush1.msra.mxu0 %v294
        %1089 = vmatprep.subr.mxu0 %v299
        %1090 = vmatpush1.msra.mxu0 %v298
        %1091 = vmatprep.subr.mxu0 %v303
        %1092 = vmatpush1.msra.mxu0 %v302
        %1093 = vmatprep.subr.mxu0 %v307
        %1094 = vmatpush1.msra.mxu0 %v306
        %1095 = vmatprep.subr.mxu0 %v311
        %1096 = vmatpush1.msra.mxu0 %v310
        %1097 = vmatprep.subr.mxu0 0.0
        %1098 = vmatpush1.msra.mxu0 0.0
        %1099 = vmatprep.subr.mxu0 0.0
        %1100 = vmatpush1.msra.mxu0 0.0
        %1101 = vmatprep.subr.mxu0 0.0
        %1102 = vmatpush1.msra.mxu0 0.0
        %1103 = vmatprep.subr.mxu0 0.0
        %1104 = vmatpush1.msra.mxu0 0.0
        %1105 = vmatprep.subr.mxu0 0.0
        %1106 = vmatpush1.msra.mxu0 0.0
        %1107 = vmatprep.subr.mxu0 0.0
        %1108 = vmatpush1.msra.mxu0 0.0
        %1109 = vmatprep.subr.mxu0 0.0
        %1110 = vmatpush1.msra.mxu0 0.0
        %1111 = vmatprep.subr.mxu0 0.0
        %1112 = vmatpush1.msra.mxu0 0.0
        %1113 = vmatprep.subr.mxu0 0.0
        %1114 = vmatpush1.msra.mxu0 0.0
        %1115 = vmatprep.subr.mxu0 0.0
        %1116 = vmatpush1.msra.mxu0 0.0
        %1117 = vmatprep.subr.mxu0 0.0
        %1118 = vmatpush1.msra.mxu0 0.0
        %1119 = vmatprep.subr.mxu0 0.0
        %1120 = vmatpush1.msra.mxu0 0.0
        %1121 = vmatprep.subr.mxu0 0.0
        %1122 = vmatpush1.msra.mxu0 0.0
        %1123 = vmatprep.subr.mxu0 0.0
        %1124 = vmatpush1.msra.mxu0 0.0
        %1125 = vmatprep.subr.mxu0 0.0
        %1126 = vmatpush1.msra.mxu0 0.0
        %1127 = vmatprep.subr.mxu0 0.0
        %1128 = vmatpush1.msra.mxu0 0.0
        %1129 = vmatprep.mubr.f32.mxu0 0.0
        %1130 = vmatmul.mubr.f32.gmra.mrb[0].mxu0 %v988
        %v1131 = vpop.f32.mrb[0].mxu0
        %v1132 = vadd.f32 0.0, %v1131
        %v1133 = vpop.f32.mrb[0].mxu0
        %v1134 = vadd.f32 0.0, %v1133
        %1135 = vdwg.mxu0
        %v1136 = vadd.f32 %v990, %v1061
        %v1137 = vadd.f32 %v991, %v1063
        %v1138 = vadd.f32 %v992, %v1132
        %v1139 = vadd.f32 %v993, %v1134
        %v1140 = vmul.f32 %v1136, 0.5
        %v1141 = vtanh.pop %v1140
        %v1142 = vadd.f32 %v1141, 1.0
        %v1143 = vmul.f32 %v1142, 0.5
        %v1144 = vmul.f32 %v1137, 0.5
        %v1145 = vtanh.pop %v1144
        %v1146 = vadd.f32 %v1145, 1.0
        %v1147 = vmul.f32 %v1146, 0.5
        %v1148 = vtanh.pop %v1138
        %v1149 = vmul.f32 %v1139, 0.5
        %v1150 = vtanh.pop %v1149
        %v1151 = vadd.f32 %v1150, 1.0
        %v1152 = vmul.f32 %v1151, 0.5
        %v1153 = vmul.f32 %v1147, %v986
        %v1154 = vmul.f32 %v1143, %v1148
        %v1155 = vadd.f32 %v1153, %v1154
        %v1156 = vtanh.pop %v1155
        %v1157 = vmul.f32 %v1152, %v1156
        %s1158 = scalar_lea.vmem %s219, 160 [#allocation4]
        %v1159 = vld [vmem:[%s1158] sm:$0xff]
        %v1160 = vld [vmem:[%s1158 + $0x8] sm:$0xff]
        %v1161 = vld [vmem:[%s1158 + $0x10] sm:$0xff]
        %v1162 = vld [vmem:[%s1158 + $0x18] sm:$0xff]
        %1163 = vmatprep.subr.mxu0 %v249
        %1164 = vmatpush1.msra.mxu0 %v248
        %1165 = vmatprep.subr.mxu0 %v253
        %1166 = vmatpush1.msra.mxu0 %v252
        %1167 = vmatprep.subr.mxu0 %v257
        %1168 = vmatpush1.msra.mxu0 %v256
        %1169 = vmatprep.subr.mxu0 %v261
        %1170 = vmatpush1.msra.mxu0 %v260
        %1171 = vmatprep.subr.mxu0 %v265
        %1172 = vmatpush1.msra.mxu0 %v264
        %1173 = vmatprep.subr.mxu0 %v269
        %1174 = vmatpush1.msra.mxu0 %v268
        %1175 = vmatprep.subr.mxu0 %v273
        %1176 = vmatpush1.msra.mxu0 %v272
        %1177 = vmatprep.subr.mxu0 %v277
        %1178 = vmatpush1.msra.mxu0 %v276
        %1179 = vmatprep.subr.mxu0 %v281
        %1180 = vmatpush1.msra.mxu0 %v280
        %1181 = vmatprep.subr.mxu0 %v285
        %1182 = vmatpush1.msra.mxu0 %v284
        %1183 = vmatprep.subr.mxu0 %v289
        %1184 = vmatpush1.msra.mxu0 %v288
        %1185 = vmatprep.subr.mxu0 %v293
        %1186 = vmatpush1.msra.mxu0 %v292
        %1187 = vmatprep.subr.mxu0 %v297
        %1188 = vmatpush1.msra.mxu0 %v296
        %1189 = vmatprep.subr.mxu0 %v301
        %1190 = vmatpush1.msra.mxu0 %v300
        %1191 = vmatprep.subr.mxu0 %v305
        %1192 = vmatpush1.msra.mxu0 %v304
        %1193 = vmatprep.subr.mxu0 %v309
        %1194 = vmatpush1.msra.mxu0 %v308
        %1195 = vmatprep.subr.mxu0 0.0
        %1196 = vmatpush1.msra.mxu0 0.0
        %1197 = vmatprep.subr.mxu0 0.0
        %1198 = vmatpush1.msra.mxu0 0.0
        %1199 = vmatprep.subr.mxu0 0.0
        %1200 = vmatpush1.msra.mxu0 0.0
        %1201 = vmatprep.subr.mxu0 0.0
        %1202 = vmatpush1.msra.mxu0 0.0
        %1203 = vmatprep.subr.mxu0 0.0
        %1204 = vmatpush1.msra.mxu0 0.0
        %1205 = vmatprep.subr.mxu0 0.0
        %1206 = vmatpush1.msra.mxu0 0.0
        %1207 = vmatprep.subr.mxu0 0.0
        %1208 = vmatpush1.msra.mxu0 0.0
        %1209 = vmatprep.subr.mxu0 0.0
        %1210 = vmatpush1.msra.mxu0 0.0
        %1211 = vmatprep.subr.mxu0 0.0
        %1212 = vmatpush1.msra.mxu0 0.0
        %1213 = vmatprep.subr.mxu0 0.0
        %1214 = vmatpush1.msra.mxu0 0.0
        %1215 = vmatprep.subr.mxu0 0.0
        %1216 = vmatpush1.msra.mxu0 0.0
        %1217 = vmatprep.subr.mxu0 0.0
        %1218 = vmatpush1.msra.mxu0 0.0
        %1219 = vmatprep.subr.mxu0 0.0
        %1220 = vmatpush1.msra.mxu0 0.0
        %1221 = vmatprep.subr.mxu0 0.0
        %1222 = vmatpush1.msra.mxu0 0.0
        %1223 = vmatprep.subr.mxu0 0.0
        %1224 = vmatpush1.msra.mxu0 0.0
        %1225 = vmatprep.subr.mxu0 0.0
        %1226 = vmatpush1.msra.mxu0 0.0
        %1227 = vmatprep.mubr.f32.mxu0 0.0
        %1228 = vmatmul.mubr.f32.gmra.mrb[0].mxu0 %v1157
        %v1229 = vpop.f32.mrb[0].mxu0
        %v1230 = vadd.f32 0.0, %v1229
        %v1231 = vpop.f32.mrb[0].mxu0
        %v1232 = vadd.f32 0.0, %v1231
        %1233 = vdwg.mxu0
        %1234 = vmatprep.subr.mxu0 %v251
        %1235 = vmatpush1.msra.mxu0 %v250
        %1236 = vmatprep.subr.mxu0 %v255
        %1237 = vmatpush1.msra.mxu0 %v254
        %1238 = vmatprep.subr.mxu0 %v259
        %1239 = vmatpush1.msra.mxu0 %v258
        %1240 = vmatprep.subr.mxu0 %v263
        %1241 = vmatpush1.msra.mxu0 %v262
        %1242 = vmatprep.subr.mxu0 %v267
        %1243 = vmatpush1.msra.mxu0 %v266
        %1244 = vmatprep.subr.mxu0 %v271
        %1245 = vmatpush1.msra.mxu0 %v270
        %1246 = vmatprep.subr.mxu0 %v275
        %1247 = vmatpush1.msra.mxu0 %v274
        %1248 = vmatprep.subr.mxu0 %v279
        %1249 = vmatpush1.msra.mxu0 %v278
        %1250 = vmatprep.subr.mxu0 %v283
        %1251 = vmatpush1.msra.mxu0 %v282
        %1252 = vmatprep.subr.mxu0 %v287
        %1253 = vmatpush1.msra.mxu0 %v286
        %1254 = vmatprep.subr.mxu0 %v291
        %1255 = vmatpush1.msra.mxu0 %v290
        %1256 = vmatprep.subr.mxu0 %v295
        %1257 = vmatpush1.msra.mxu0 %v294
        %1258 = vmatprep.subr.mxu0 %v299
        %1259 = vmatpush1.msra.mxu0 %v298
        %1260 = vmatprep.subr.mxu0 %v303
        %1261 = vmatpush1.msra.mxu0 %v302
        %1262 = vmatprep.subr.mxu0 %v307
        %1263 = vmatpush1.msra.mxu0 %v306
        %1264 = vmatprep.subr.mxu0 %v311
        %1265 = vmatpush1.msra.mxu0 %v310
        %1266 = vmatprep.subr.mxu0 0.0
        %1267 = vmatpush1.msra.mxu0 0.0
        %1268 = vmatprep.subr.mxu0 0.0
        %1269 = vmatpush1.msra.mxu0 0.0
        %1270 = vmatprep.subr.mxu0 0.0
        %1271 = vmatpush1.msra.mxu0 0.0
        %1272 = vmatprep.subr.mxu0 0.0
        %1273 = vmatpush1.msra.mxu0 0.0
        %1274 = vmatprep.subr.mxu0 0.0
        %1275 = vmatpush1.msra.mxu0 0.0
        %1276 = vmatprep.subr.mxu0 0.0
        %1277 = vmatpush1.msra.mxu0 0.0
        %1278 = vmatprep.subr.mxu0 0.0
        %1279 = vmatpush1.msra.mxu0 0.0
        %1280 = vmatprep.subr.mxu0 0.0
        %1281 = vmatpush1.msra.mxu0 0.0
        %1282 = vmatprep.subr.mxu0 0.0
        %1283 = vmatpush1.msra.mxu0 0.0
        %1284 = vmatprep.subr.mxu0 0.0
        %1285 = vmatpush1.msra.mxu0 0.0
        %1286 = vmatprep.subr.mxu0 0.0
        %1287 = vmatpush1.msra.mxu0 0.0
        %1288 = vmatprep.subr.mxu0 0.0
        %1289 = vmatpush1.msra.mxu0 0.0
        %1290 = vmatprep.subr.mxu0 0.0
        %1291 = vmatpush1.msra.mxu0 0.0
        %1292 = vmatprep.subr.mxu0 0.0
        %1293 = vmatpush1.msra.mxu0 0.0
        %1294 = vmatprep.subr.mxu0 0.0
        %1295 = vmatpush1.msra.mxu0 0.0
        %1296 = vmatprep.subr.mxu0 0.0
        %1297 = vmatpush1.msra.mxu0 0.0
        %1298 = vmatprep.mubr.f32.mxu0 0.0
        %1299 = vmatmul.mubr.f32.gmra.mrb[0].mxu0 %v1157
        %v1300 = vpop.f32.mrb[0].mxu0
        %v1301 = vadd.f32 0.0, %v1300
        %v1302 = vpop.f32.mrb[0].mxu0
        %v1303 = vadd.f32 0.0, %v1302
        %1304 = vdwg.mxu0
        %v1305 = vadd.f32 %v1159, %v1230
        %v1306 = vadd.f32 %v1160, %v1232
        %v1307 = vadd.f32 %v1161, %v1301
        %v1308 = vadd.f32 %v1162, %v1303
        %v1309 = vmul.f32 %v1305, 0.5
        %v1310 = vtanh.pop %v1309
        %v1311 = vadd.f32 %v1310, 1.0
        %v1312 = vmul.f32 %v1311, 0.5
        %v1313 = vmul.f32 %v1306, 0.5
        %v1314 = vtanh.pop %v1313
        %v1315 = vadd.f32 %v1314, 1.0
        %v1316 = vmul.f32 %v1315, 0.5
        %v1317 = vtanh.pop %v1307
        %v1318 = vmul.f32 %v1308, 0.5
        %v1319 = vtanh.pop %v1318
        %v1320 = vadd.f32 %v1319, 1.0
        %v1321 = vmul.f32 %v1320, 0.5
        %v1322 = vmul.f32 %v1316, %v1155
        %v1323 = vmul.f32 %v1312, %v1317
        %v1324 = vadd.f32 %v1322, %v1323
        %v1325 = vtanh.pop %v1324
        %v1326 = vmul.f32 %v1321, %v1325
        %s1327 = scalar_lea.vmem %s219, 192 [#allocation4]
        %v1328 = vld [vmem:[%s1327] sm:$0xff]
        %v1329 = vld [vmem:[%s1327 + $0x8] sm:$0xff]
        %v1330 = vld [vmem:[%s1327 + $0x10] sm:$0xff]
        %v1331 = vld [vmem:[%s1327 + $0x18] sm:$0xff]
        %1332 = vmatprep.subr.mxu0 %v249
        %1333 = vmatpush1.msra.mxu0 %v248
        %1334 = vmatprep.subr.mxu0 %v253
        %1335 = vmatpush1.msra.mxu0 %v252
        %1336 = vmatprep.subr.mxu0 %v257
        %1337 = vmatpush1.msra.mxu0 %v256
        %1338 = vmatprep.subr.mxu0 %v261
        %1339 = vmatpush1.msra.mxu0 %v260
        %1340 = vmatprep.subr.mxu0 %v265
        %1341 = vmatpush1.msra.mxu0 %v264
        %1342 = vmatprep.subr.mxu0 %v269
        %1343 = vmatpush1.msra.mxu0 %v268
        %1344 = vmatprep.subr.mxu0 %v273
        %1345 = vmatpush1.msra.mxu0 %v272
        %1346 = vmatprep.subr.mxu0 %v277
        %1347 = vmatpush1.msra.mxu0 %v276
        %1348 = vmatprep.subr.mxu0 %v281
        %1349 = vmatpush1.msra.mxu0 %v280
        %1350 = vmatprep.subr.mxu0 %v285
        %1351 = vmatpush1.msra.mxu0 %v284
        %1352 = vmatprep.subr.mxu0 %v289
        %1353 = vmatpush1.msra.mxu0 %v288
        %1354 = vmatprep.subr.mxu0 %v293
        %1355 = vmatpush1.msra.mxu0 %v292
        %1356 = vmatprep.subr.mxu0 %v297
        %1357 = vmatpush1.msra.mxu0 %v296
        %1358 = vmatprep.subr.mxu0 %v301
        %1359 = vmatpush1.msra.mxu0 %v300
        %1360 = vmatprep.subr.mxu0 %v305
        %1361 = vmatpush1.msra.mxu0 %v304
        %1362 = vmatprep.subr.mxu0 %v309
        %1363 = vmatpush1.msra.mxu0 %v308
        %1364 = vmatprep.subr.mxu0 0.0
        %1365 = vmatpush1.msra.mxu0 0.0
        %1366 = vmatprep.subr.mxu0 0.0
        %1367 = vmatpush1.msra.mxu0 0.0
        %1368 = vmatprep.subr.mxu0 0.0
        %1369 = vmatpush1.msra.mxu0 0.0
        %1370 = vmatprep.subr.mxu0 0.0
        %1371 = vmatpush1.msra.mxu0 0.0
        %1372 = vmatprep.subr.mxu0 0.0
        %1373 = vmatpush1.msra.mxu0 0.0
        %1374 = vmatprep.subr.mxu0 0.0
        %1375 = vmatpush1.msra.mxu0 0.0
        %1376 = vmatprep.subr.mxu0 0.0
        %1377 = vmatpush1.msra.mxu0 0.0
        %1378 = vmatprep.subr.mxu0 0.0
        %1379 = vmatpush1.msra.mxu0 0.0
        %1380 = vmatprep.subr.mxu0 0.0
        %1381 = vmatpush1.msra.mxu0 0.0
        %1382 = vmatprep.subr.mxu0 0.0
        %1383 = vmatpush1.msra.mxu0 0.0
        %1384 = vmatprep.subr.mxu0 0.0
        %1385 = vmatpush1.msra.mxu0 0.0
        %1386 = vmatprep.subr.mxu0 0.0
        %1387 = vmatpush1.msra.mxu0 0.0
        %1388 = vmatprep.subr.mxu0 0.0
        %1389 = vmatpush1.msra.mxu0 0.0
        %1390 = vmatprep.subr.mxu0 0.0
        %1391 = vmatpush1.msra.mxu0 0.0
        %1392 = vmatprep.subr.mxu0 0.0
        %1393 = vmatpush1.msra.mxu0 0.0
        %1394 = vmatprep.subr.mxu0 0.0
        %1395 = vmatpush1.msra.mxu0 0.0
        %1396 = vmatprep.mubr.f32.mxu0 0.0
        %1397 = vmatmul.mubr.f32.gmra.mrb[0].mxu0 %v1326
        %v1398 = vpop.f32.mrb[0].mxu0
        %v1399 = vadd.f32 0.0, %v1398
        %v1400 = vpop.f32.mrb[0].mxu0
        %v1401 = vadd.f32 0.0, %v1400
        %1402 = vdwg.mxu0
        %1403 = vmatprep.subr.mxu0 %v251
        %1404 = vmatpush1.msra.mxu0 %v250
        %1405 = vmatprep.subr.mxu0 %v255
        %1406 = vmatpush1.msra.mxu0 %v254
        %1407 = vmatprep.subr.mxu0 %v259
        %1408 = vmatpush1.msra.mxu0 %v258
        %1409 = vmatprep.subr.mxu0 %v263
        %1410 = vmatpush1.msra.mxu0 %v262
        %1411 = vmatprep.subr.mxu0 %v267
        %1412 = vmatpush1.msra.mxu0 %v266
        %1413 = vmatprep.subr.mxu0 %v271
        %1414 = vmatpush1.msra.mxu0 %v270
        %1415 = vmatprep.subr.mxu0 %v275
        %1416 = vmatpush1.msra.mxu0 %v274
        %1417 = vmatprep.subr.mxu0 %v279
        %1418 = vmatpush1.msra.mxu0 %v278
        %1419 = vmatprep.subr.mxu0 %v283
        %1420 = vmatpush1.msra.mxu0 %v282
        %1421 = vmatprep.subr.mxu0 %v287
        %1422 = vmatpush1.msra.mxu0 %v286
        %1423 = vmatprep.subr.mxu0 %v291
        %1424 = vmatpush1.msra.mxu0 %v290
        %1425 = vmatprep.subr.mxu0 %v295
        %1426 = vmatpush1.msra.mxu0 %v294
        %1427 = vmatprep.subr.mxu0 %v299
        %1428 = vmatpush1.msra.mxu0 %v298
        %1429 = vmatprep.subr.mxu0 %v303
        %1430 = vmatpush1.msra.mxu0 %v302
        %1431 = vmatprep.subr.mxu0 %v307
        %1432 = vmatpush1.msra.mxu0 %v306
        %1433 = vmatprep.subr.mxu0 %v311
        %1434 = vmatpush1.msra.mxu0 %v310
        %1435 = vmatprep.subr.mxu0 0.0
        %1436 = vmatpush1.msra.mxu0 0.0
        %1437 = vmatprep.subr.mxu0 0.0
        %1438 = vmatpush1.msra.mxu0 0.0
        %1439 = vmatprep.subr.mxu0 0.0
        %1440 = vmatpush1.msra.mxu0 0.0
        %1441 = vmatprep.subr.mxu0 0.0
        %1442 = vmatpush1.msra.mxu0 0.0
        %1443 = vmatprep.subr.mxu0 0.0
        %1444 = vmatpush1.msra.mxu0 0.0
        %1445 = vmatprep.subr.mxu0 0.0
        %1446 = vmatpush1.msra.mxu0 0.0
        %1447 = vmatprep.subr.mxu0 0.0
        %1448 = vmatpush1.msra.mxu0 0.0
        %1449 = vmatprep.subr.mxu0 0.0
        %1450 = vmatpush1.msra.mxu0 0.0
        %1451 = vmatprep.subr.mxu0 0.0
        %1452 = vmatpush1.msra.mxu0 0.0
        %1453 = vmatprep.subr.mxu0 0.0
        %1454 = vmatpush1.msra.mxu0 0.0
        %1455 = vmatprep.subr.mxu0 0.0
        %1456 = vmatpush1.msra.mxu0 0.0
        %1457 = vmatprep.subr.mxu0 0.0
        %1458 = vmatpush1.msra.mxu0 0.0
        %1459 = vmatprep.subr.mxu0 0.0
        %1460 = vmatpush1.msra.mxu0 0.0
        %1461 = vmatprep.subr.mxu0 0.0
        %1462 = vmatpush1.msra.mxu0 0.0
        %1463 = vmatprep.subr.mxu0 0.0
        %1464 = vmatpush1.msra.mxu0 0.0
        %1465 = vmatprep.subr.mxu0 0.0
        %1466 = vmatpush1.msra.mxu0 0.0
        %1467 = vmatprep.mubr.f32.mxu0 0.0
        %1468 = vmatmul.mubr.f32.gmra.mrb[0].mxu0 %v1326
        %v1469 = vpop.f32.mrb[0].mxu0
        %v1470 = vadd.f32 0.0, %v1469
        %v1471 = vpop.f32.mrb[0].mxu0
        %v1472 = vadd.f32 0.0, %v1471
        %1473 = vdwg.mxu0
        %v1474 = vadd.f32 %v1328, %v1399
        %v1475 = vadd.f32 %v1329, %v1401
        %v1476 = vadd.f32 %v1330, %v1470
        %v1477 = vadd.f32 %v1331, %v1472
        %v1478 = vmul.f32 %v1474, 0.5
        %v1479 = vtanh.pop %v1478
        %v1480 = vadd.f32 %v1479, 1.0
        %v1481 = vmul.f32 %v1480, 0.5
        %v1482 = vmul.f32 %v1475, 0.5
        %v1483 = vtanh.pop %v1482
        %v1484 = vadd.f32 %v1483, 1.0
        %v1485 = vmul.f32 %v1484, 0.5
        %v1486 = vtanh.pop %v1476
        %v1487 = vmul.f32 %v1477, 0.5
        %v1488 = vtanh.pop %v1487
        %v1489 = vadd.f32 %v1488, 1.0
        %v1490 = vmul.f32 %v1489, 0.5
        %v1491 = vmul.f32 %v1485, %v1324
        %v1492 = vmul.f32 %v1481, %v1486
        %v1493 = vadd.f32 %v1491, %v1492
        %v1494 = vtanh.pop %v1493
        %v1495 = vmul.f32 %v1490, %v1494
        %s1496 = scalar_lea.vmem %s219, 224 [#allocation4]
        %v1497 = vld [vmem:[%s1496] sm:$0xff]
        %v1498 = vld [vmem:[%s1496 + $0x8] sm:$0xff]
        %v1499 = vld [vmem:[%s1496 + $0x10] sm:$0xff]
        %v1500 = vld [vmem:[%s1496 + $0x18] sm:$0xff]
        %1501 = vmatprep.subr.mxu0 %v249
        %1502 = vmatpush1.msra.mxu0 %v248
        %1503 = vmatprep.subr.mxu0 %v253
        %1504 = vmatpush1.msra.mxu0 %v252
        %1505 = vmatprep.subr.mxu0 %v257
        %1506 = vmatpush1.msra.mxu0 %v256
        %1507 = vmatprep.subr.mxu0 %v261
        %1508 = vmatpush1.msra.mxu0 %v260
        %1509 = vmatprep.subr.mxu0 %v265
        %1510 = vmatpush1.msra.mxu0 %v264
        %1511 = vmatprep.subr.mxu0 %v269
        %1512 = vmatpush1.msra.mxu0 %v268
        %1513 = vmatprep.subr.mxu0 %v273
        %1514 = vmatpush1.msra.mxu0 %v272
        %1515 = vmatprep.subr.mxu0 %v277
        %1516 = vmatpush1.msra.mxu0 %v276
        %1517 = vmatprep.subr.mxu0 %v281
        %1518 = vmatpush1.msra.mxu0 %v280
        %1519 = vmatprep.subr.mxu0 %v285
        %1520 = vmatpush1.msra.mxu0 %v284
        %1521 = vmatprep.subr.mxu0 %v289
        %1522 = vmatpush1.msra.mxu0 %v288
        %1523 = vmatprep.subr.mxu0 %v293
        %1524 = vmatpush1.msra.mxu0 %v292
        %1525 = vmatprep.subr.mxu0 %v297
        %1526 = vmatpush1.msra.mxu0 %v296
        %1527 = vmatprep.subr.mxu0 %v301
        %1528 = vmatpush1.msra.mxu0 %v300
        %1529 = vmatprep.subr.mxu0 %v305
        %1530 = vmatpush1.msra.mxu0 %v304
        %1531 = vmatprep.subr.mxu0 %v309
        %1532 = vmatpush1.msra.mxu0 %v308
        %1533 = vmatprep.subr.mxu0 0.0
        %1534 = vmatpush1.msra.mxu0 0.0
        %1535 = vmatprep.subr.mxu0 0.0
        %1536 = vmatpush1.msra.mxu0 0.0
        %1537 = vmatprep.subr.mxu0 0.0
        %1538 = vmatpush1.msra.mxu0 0.0
        %1539 = vmatprep.subr.mxu0 0.0
        %1540 = vmatpush1.msra.mxu0 0.0
        %1541 = vmatprep.subr.mxu0 0.0
        %1542 = vmatpush1.msra.mxu0 0.0
        %1543 = vmatprep.subr.mxu0 0.0
        %1544 = vmatpush1.msra.mxu0 0.0
        %1545 = vmatprep.subr.mxu0 0.0
        %1546 = vmatpush1.msra.mxu0 0.0
        %1547 = vmatprep.subr.mxu0 0.0
        %1548 = vmatpush1.msra.mxu0 0.0
        %1549 = vmatprep.subr.mxu0 0.0
        %1550 = vmatpush1.msra.mxu0 0.0
        %1551 = vmatprep.subr.mxu0 0.0
        %1552 = vmatpush1.msra.mxu0 0.0
        %1553 = vmatprep.subr.mxu0 0.0
        %1554 = vmatpush1.msra.mxu0 0.0
        %1555 = vmatprep.subr.mxu0 0.0
        %1556 = vmatpush1.msra.mxu0 0.0
        %1557 = vmatprep.subr.mxu0 0.0
        %1558 = vmatpush1.msra.mxu0 0.0
        %1559 = vmatprep.subr.mxu0 0.0
        %1560 = vmatpush1.msra.mxu0 0.0
        %1561 = vmatprep.subr.mxu0 0.0
        %1562 = vmatpush1.msra.mxu0 0.0
        %1563 = vmatprep.subr.mxu0 0.0
        %1564 = vmatpush1.msra.mxu0 0.0
        %1565 = vmatprep.mubr.f32.mxu0 0.0
        %1566 = vmatmul.mubr.f32.gmra.mrb[0].mxu0 %v1495
        %v1567 = vpop.f32.mrb[0].mxu0
        %v1568 = vadd.f32 0.0, %v1567
        %v1569 = vpop.f32.mrb[0].mxu0
        %v1570 = vadd.f32 0.0, %v1569
        %1571 = vdwg.mxu0
        %1572 = vmatprep.subr.mxu0 %v251
        %1573 = vmatpush1.msra.mxu0 %v250
        %1574 = vmatprep.subr.mxu0 %v255
        %1575 = vmatpush1.msra.mxu0 %v254
        %1576 = vmatprep.subr.mxu0 %v259
        %1577 = vmatpush1.msra.mxu0 %v258
        %1578 = vmatprep.subr.mxu0 %v263
        %1579 = vmatpush1.msra.mxu0 %v262
        %1580 = vmatprep.subr.mxu0 %v267
        %1581 = vmatpush1.msra.mxu0 %v266
        %1582 = vmatprep.subr.mxu0 %v271
        %1583 = vmatpush1.msra.mxu0 %v270
        %1584 = vmatprep.subr.mxu0 %v275
        %1585 = vmatpush1.msra.mxu0 %v274
        %1586 = vmatprep.subr.mxu0 %v279
        %1587 = vmatpush1.msra.mxu0 %v278
        %1588 = vmatprep.subr.mxu0 %v283
        %1589 = vmatpush1.msra.mxu0 %v282
        %1590 = vmatprep.subr.mxu0 %v287
        %1591 = vmatpush1.msra.mxu0 %v286
        %1592 = vmatprep.subr.mxu0 %v291
        %1593 = vmatpush1.msra.mxu0 %v290
        %1594 = vmatprep.subr.mxu0 %v295
        %1595 = vmatpush1.msra.mxu0 %v294
        %1596 = vmatprep.subr.mxu0 %v299
        %1597 = vmatpush1.msra.mxu0 %v298
        %1598 = vmatprep.subr.mxu0 %v303
        %1599 = vmatpush1.msra.mxu0 %v302
        %1600 = vmatprep.subr.mxu0 %v307
        %1601 = vmatpush1.msra.mxu0 %v306
        %1602 = vmatprep.subr.mxu0 %v311
        %1603 = vmatpush1.msra.mxu0 %v310
        %1604 = vmatprep.subr.mxu0 0.0
        %1605 = vmatpush1.msra.mxu0 0.0
        %1606 = vmatprep.subr.mxu0 0.0
        %1607 = vmatpush1.msra.mxu0 0.0
        %1608 = vmatprep.subr.mxu0 0.0
        %1609 = vmatpush1.msra.mxu0 0.0
        %1610 = vmatprep.subr.mxu0 0.0
        %1611 = vmatpush1.msra.mxu0 0.0
        %1612 = vmatprep.subr.mxu0 0.0
        %1613 = vmatpush1.msra.mxu0 0.0
        %1614 = vmatprep.subr.mxu0 0.0
        %1615 = vmatpush1.msra.mxu0 0.0
        %1616 = vmatprep.subr.mxu0 0.0
        %1617 = vmatpush1.msra.mxu0 0.0
        %1618 = vmatprep.subr.mxu0 0.0
        %1619 = vmatpush1.msra.mxu0 0.0
        %1620 = vmatprep.subr.mxu0 0.0
        %1621 = vmatpush1.msra.mxu0 0.0
        %1622 = vmatprep.subr.mxu0 0.0
        %1623 = vmatpush1.msra.mxu0 0.0
        %1624 = vmatprep.subr.mxu0 0.0
        %1625 = vmatpush1.msra.mxu0 0.0
        %1626 = vmatprep.subr.mxu0 0.0
        %1627 = vmatpush1.msra.mxu0 0.0
        %1628 = vmatprep.subr.mxu0 0.0
        %1629 = vmatpush1.msra.mxu0 0.0
        %1630 = vmatprep.subr.mxu0 0.0
        %1631 = vmatpush1.msra.mxu0 0.0
        %1632 = vmatprep.subr.mxu0 0.0
        %1633 = vmatpush1.msra.mxu0 0.0
        %1634 = vmatprep.subr.mxu0 0.0
        %1635 = vmatpush1.msra.mxu0 0.0
        %1636 = vmatprep.mubr.f32.mxu0 0.0
        %1637 = vmatmul.mubr.f32.gmra.mrb[0].mxu0 %v1495
        %v1638 = vpop.f32.mrb[0].mxu0
        %v1639 = vadd.f32 0.0, %v1638
        %v1640 = vpop.f32.mrb[0].mxu0
        %v1641 = vadd.f32 0.0, %v1640
        %1642 = vdwg.mxu0
        %v1643 = vadd.f32 %v1497, %v1568
        %v1644 = vadd.f32 %v1498, %v1570
        %v1645 = vadd.f32 %v1499, %v1639
        %v1646 = vadd.f32 %v1500, %v1641
        %v1647 = vmul.f32 %v1643, 0.5
        %v1648 = vtanh.pop %v1647
        %v1649 = vadd.f32 %v1648, 1.0
        %v1650 = vmul.f32 %v1649, 0.5
        %v1651 = vmul.f32 %v1644, 0.5
        %v1652 = vtanh.pop %v1651
        %v1653 = vadd.f32 %v1652, 1.0
        %v1654 = vmul.f32 %v1653, 0.5
        %v1655 = vtanh.pop %v1645
        %v1656 = vmul.f32 %v1646, 0.5
        %v1657 = vtanh.pop %v1656
        %v1658 = vadd.f32 %v1657, 1.0
        %v1659 = vmul.f32 %v1658, 0.5
        %v1660 = vmul.f32 %v1654, %v1493
        %v1661 = vmul.f32 %v1650, %v1655
        %v1662 = vadd.f32 %v1660, %v1661
        %v1663 = vtanh.pop %v1662
        %v1664 = vmul.f32 %v1659, %v1663
        %1665 = vst [vmem:[#allocation2] sm:$0xff] %v1664
        %1666 = vst [vmem:[#allocation3] sm:$0xff] %v1662
        // Predicated region
        $region56: #{simple_lstm_forward.3} parent=46 // pred_check
          %p1667 = pneg %p242
        $region57: #{simple_lstm_forward.3} parent=46 // pred_check_branch
          %1669 = sbr.rel (%p1667) target = $region59
        $region58: #{simple_lstm_forward.3} parent=46 // pred_region
          %1670 = vst [vmem:[%s241] sm:$0xff] %v1664
        $region59: #{simple_lstm_forward.3} parent=46 // pred_fallthru
          _
        %p1671 = scmp.lt.s32.totalorder %s17, 1
        %s1672 = scalar_select %p1671, %s17, 1
        %s1673 = smul.addr %s1672, 8
        %s1674 = scalar_lea.vmem %s2, %s1673
        // Predicated region
        $region60: #{simple_lstm_forward.3} parent=46 // pred_check
          %p1675 = pneg %p92
        $region61: #{simple_lstm_forward.3} parent=46 // pred_check_branch
          %1677 = sbr.rel (%p1675) target = $region63
        $region62: #{simple_lstm_forward.3} parent=46 // pred_region
          _
        $region63: #{simple_lstm_forward.3} parent=46 // pred_fallthru
          _
      $region47: #{simple_lstm_forward.3} parent=5 // pred_fallthru
        _
      %p1678 = scmp.le.s32.totalorder 2, %s8
      // Predicated region
      $region64: #{simple_lstm_forward.3} parent=5 // pred_check
        %p1679 = pneg %p1678
      $region65: #{simple_lstm_forward.3} parent=5 // pred_check_branch
        %1681 = sbr.rel (%p1679) target = $region67
      $region66: #{simple_lstm_forward.3} parent=5 // pred_region
        %s1682 = ssub.s32 %s8, 2
        // Predicated region
        $region68: #{simple_lstm_forward.3} parent=66 // pred_check
          %p1683 = pneg %p98
        $region69: #{simple_lstm_forward.3} parent=66 // pred_check_branch
          %1685 = sbr.rel (%p1683) target = $region71
        $region70: #{simple_lstm_forward.3} parent=66 // pred_region
          %p1686 = scmp.lt.s32.totalorder %s19, 1
          %s1687 = scalar_select %p1686, %s19, 1
          %s1688 = smul.addr %s1687, 8
          %s1689 = scalar_lea.vmem %s2, %s1688
        $region71: #{simple_lstm_forward.3} parent=66 // pred_fallthru
          _
      $region67: #{simple_lstm_forward.3} parent=5 // pred_fallthru
        _
    $region6: #{simple_lstm_forward.3} parent=1 // loop_footer
      %s12 = sadd.s32 1, %s8
    $region7: #{simple_lstm_forward.3} parent=1 // loop_footer_branch
      %7 = sbr.rel target = $region3
    $region8: #{simple_lstm_forward.3} parent=1 // loop_exit
      _

</llo_original>
